<compile_context>
chip_gen: v6e
topology: v6e:2x2x1
jax: 0.10.0
libtpu: 0.0.40
codegen_flags: <defaults>
</compile_context>

<pallas_src>
import functools

import jax
import jax.numpy as jnp
from jax import lax
from jax.experimental import pallas as pl
from jax.experimental.pallas import tpu as pltpu


def _round_up(x, m):
  return (x + m - 1) // m * m


def _sigmoid(x):
  # tanh-based sigmoid: numerically safe (no exp overflow) and runs on the EUP,
  # keeping the VALU slot free.  Python-float constants keep the compute dtype.
  return 0.5 * (jnp.tanh(0.5 * x) + 1.0)


def _tpu_config():
  """(max_spatial_tile, vmem_limit_bytes, swish_compute_dtype) per chip generation."""
  kind = ""
  try:
    kind = jax.devices()[0].device_kind.lower()
  except Exception:  # pragma: no cover
    pass
  if "v7" in kind:          # 64 MiB physical VMEM: leave headroom; bf16 EUP/VPU.
    return 16384, 48 * 1024 * 1024, jnp.bfloat16
  if "v6" in kind:          # 128 MiB VMEM; bf16 EUP/VPU.
    return 32768, 80 * 1024 * 1024, jnp.bfloat16
  if "v5 lite" in kind or "v5e" in kind or "v5lite" in kind:
    return 32768, 80 * 1024 * 1024, jnp.float32   # 128 MiB VMEM; no bf16 VPU/EUP.
  return 8192, 32 * 1024 * 1024, jnp.float32       # conservative default.


# ----------------------------- Pallas kernels --------------------------------


def _pool_kernel(y_ref, bc_ref, part_ref, *, s_total, s_tile, blocks_per_chunk,
                 needs_mask, compute_dtype):
  """bias + swish + masked partial spatial sum.

  Grid: (spatial_chunks [parallel], batch_blocks [parallel], blocks_per_chunk [arbitrary]).

  y_ref   : (BT, C, TS)  bf16 stem-conv activations (bias NOT yet added)
  bc_ref  : (C, 1)       f32  stem-conv bias
  part_ref: (BT, C)      f32  running spatial sum of swish(conv + bias) for this
                              (chunk, batch-block) — output-resident accumulator.
  """
  c_idx = pl.program_id(0)
  j = pl.program_id(2)

  @pl.when(j == 0)
  def _():
    part_ref[...] = jnp.zeros_like(part_ref)

  g = c_idx * blocks_per_chunk + j                 # global spatial block index (unclamped)

  h = y_ref[...].astype(compute_dtype)             # (BT, C, TS)
  h = h + bc_ref[...].astype(compute_dtype)[None]  # + bias, (1, C, 1) broadcast
  h = h * _sigmoid(h)                              # swish

  if needs_mask:
    # Ragged S tail / fully out-of-range chunk blocks: zero masked lanes before the sum
    # (Pallas does not zero out-of-bounds columns of a partial block).
    lane = lax.broadcasted_iota(jnp.int32, (1, 1, h.shape[-1]), 2)
    valid = s_total - g * s_tile                   # may be <= 0 (whole block masked)
    h = jnp.where(lane < valid, h, 0.0)

  part_ref[...] += jnp.sum(h.astype(jnp.float32), axis=2)


def _epilogue_kernel(part_ref, wp_ref, bpb_ref, wh_ref, bh_ref, o_ref, *, inv_s):
  """chunk-sum -> average -> 1280-d projection -> swish -> 4 heads (+ sigmoid on fc3).

  part_ref: (n_chunks, B, C) f32 partial pooled sums
  wp_ref  : (C, F) f32, bpb_ref: (1, F) f32          projection to encoded feature
  wh_ref  : (F, 12) f32, bh_ref: (1, 12) f32          [fc1 | fc2 | fc3 | fc4] concatenated
  o_ref   : (B, 12) f32                               [os, pfs, sigmoid(age), label(9)]
  """
  pooled = jnp.sum(part_ref[...], axis=0) * inv_s                  # global average pool
  enc = jnp.dot(pooled, wp_ref[...],
                preferred_element_type=jnp.float32) + bpb_ref[...]
  enc = enc * _sigmoid(enc)                                        # (B, 1280) "encoded"
  out = jnp.dot(enc, wh_ref[...],
                preferred_element_type=jnp.float32) + bh_ref[...]  # (B, 12)
  col = lax.broadcasted_iota(jnp.int32, out.shape, 1)
  # NOTE: sub-128 lane output => masked store, but this epilogue runs once (negligible).
  o_ref[...] = jnp.where(col == 2, _sigmoid(out), out)             # sigmoid on fc3 ("age")


# ------------------------------- JAX glue ------------------------------------


def init_params(key, c_in=3, c_stem=32, feat=1280):
  k = 3
  ks = jax.random.split(key, 6)
  scale = 0.05
  wc = jax.random.normal(ks[0], (c_stem, c_in, k, k, k), jnp.float32) * scale  # OIDHW
  bc = jax.random.normal(ks[1], (c_stem,), jnp.float32) * scale
  wp = jax.random.normal(ks[2], (c_stem, feat), jnp.float32) * scale
  bp = jax.random.normal(ks[3], (1, feat), jnp.float32) * scale
  # heads: fc1(1280->1), fc2(1280->1), fc3(1280->1), fc4(1280->9) concatenated.
  wh = jax.random.normal(ks[4], (feat, 12), jnp.float32) * scale
  bh = jax.random.normal(ks[5], (1, 12), jnp.float32) * scale
  return dict(wc=wc, bc=bc, wp=wp, bp=bp, wh=wh, bh=bh)


@functools.partial(jax.jit, static_argnames=("max_s_tile",))
def efficientnet_forward(x, params, max_s_tile=None):
  """x: [B, 3, D, H, W] float32 (NCDHW). Returns (os, pfs, age, label)."""
  b = x.shape[0]
  c_stem, feat = params["wp"].shape
  cfg_ts, vmem_limit, swish_dtype = _tpu_config()
  if max_s_tile is None:
    max_s_tile = cfg_ts

  # Stem conv (3x3x3, stride 2, pad 1) via XLA: bf16 operands, f32 MXU accumulation,
  # bf16 output fused into the conv epilogue (no extra f32 pass; bias folded into the
  # Pallas kernel below).
  y = lax.conv_general_dilated(
      x.astype(jnp.bfloat16), params["wc"].astype(jnp.bfloat16),
      window_strides=(2, 2, 2), padding=((1, 1), (1, 1), (1, 1)),
      dimension_numbers=("NCDHW", "OIDHW", "NCDHW"),
      preferred_element_type=jnp.bfloat16)                 # [B, C, D', H', W'] bf16
  y = y.reshape(b, c_stem, -1)                             # [B, C, S] bf16 stream
  s = y.shape[-1]

  ts = min(max_s_tile, _round_up(s, 128))                  # lane-axis tile (mult. of 128)
  n_sb = pl.cdiv(s, ts)                                    # spatial blocks (no padding!)
  bt = min(b, 8)                                           # adaptive batch tile
  b_blocks = pl.cdiv(b, bt)
  b_rows = b_blocks * bt
  # Split the spatial reduction into 2 parallel chunks when batch alone cannot feed
  # both TensorCores of a megacore part (v7x): ~2x for small-batch inference.
  n_chunks = 2 if (b_blocks == 1 and n_sb >= 2) else 1
  spb = pl.cdiv(n_sb, n_chunks)                            # spatial blocks per chunk
  needs_mask = (s % ts != 0) or (n_chunks * spb != n_sb)

  grid = (n_chunks, b_blocks, spb)

  partial = pl.pallas_call(
      functools.partial(_pool_kernel, s_total=s, s_tile=ts, blocks_per_chunk=spb,
                        needs_mask=needs_mask, compute_dtype=swish_dtype),
      out_shape=jax.ShapeDtypeStruct((n_chunks, b_rows, c_stem), jnp.float32),
      grid_spec=pltpu.PrefetchScalarGridSpec(
          num_scalar_prefetch=0,
          grid=grid,
          in_specs=[
              pl.BlockSpec(
                  (bt, c_stem, ts),
                  lambda c, i, j: (i, 0, jnp.minimum(c * spb + j, n_sb - 1))),
              pl.BlockSpec((c_stem, 1), lambda c, i, j: (0, 0)),
          ],
          out_specs=pl.BlockSpec((None, bt, c_stem), lambda c, i, j: (c, i, 0)),
      ),
      compiler_params=pltpu.CompilerParams(
          dimension_semantics=("parallel", "parallel", "arbitrary"),
          vmem_limit_bytes=vmem_limit),
  )(y, params["bc"].reshape(c_stem, 1))

  # Tiny epilogue: (B,32)@(32,1280) + swish + (B,1280)@(1280,12) + sigmoid(fc3).
  out = pl.pallas_call(
      functools.partial(_epilogue_kernel, inv_s=1.0 / s),
      out_shape=jax.ShapeDtypeStruct((b_rows, 12), jnp.float32),
  )(partial, params["wp"], params["bp"], params["wh"], params["bh"])

  out = out[:b]                                            # drop any batch-tile padding rows
  os_ = out[:, 0:1]
  pfs = out[:, 1:2]
  age = out[:, 2:3]        # sigmoid already applied inside the kernel
  label = out[:, 3:12]
  return os_, pfs, age, label


def reference_forward(x, params):
  """Pure-JAX f32 reference of the same forward (for correctness checking)."""
  b = x.shape[0]
  c_stem = params["bc"].shape[0]
  y = lax.conv_general_dilated(
      x, params["wc"], window_strides=(2, 2, 2),
      padding=((1, 1), (1, 1), (1, 1)),
      dimension_numbers=("NCDHW", "OIDHW", "NCDHW"))
  y = y + params["bc"].reshape(1, c_stem, 1, 1, 1)
  y = y * jax.nn.sigmoid(y)
  pooled = y.reshape(b, c_stem, -1).mean(axis=-1)
  enc = pooled @ params["wp"] + params["bp"]
  enc = enc * jax.nn.sigmoid(enc)
  out = enc @ params["wh"] + params["bh"]
  return (out[:, 0:1], out[:, 1:2], jax.nn.sigmoid(out[:, 2:3]), out[:, 3:12])


if __name__ == "__main__":
  key = jax.random.PRNGKey(0)
  k_param, k_x = jax.random.split(key)

  params = init_params(k_param)
  # Small 3-D input consistent with the module: batch=2, in_channels=3, 18^3 volume
  # (conv output 9^3 = 729 spatial positions — exercises the ragged-tail mask).
  x = jax.random.normal(k_x, (2, 3, 18, 18, 18), jnp.float32)

  # Small-tile run exercises multi-block spatial reduction, 2-chunk split and OOB-block
  # masking; default run uses the production (chip-adaptive) tile config.
  outs_small = efficientnet_forward(x, params, max_s_tile=256)
  outs_default = efficientnet_forward(x, params)
  jax.block_until_ready((outs_small, outs_default))

  refs = reference_forward(x, params)

  for outs in (outs_small, outs_default):
    os_, pfs, age, label = outs
    assert os_.shape == (2, 1) and pfs.shape == (2, 1)
    assert age.shape == (2, 1) and label.shape == (2, 9)
    assert bool(jnp.all((age >= 0.0) & (age <= 1.0)))
    for o, r in zip(outs, refs):
      assert bool(jnp.all(jnp.isfinite(o)))
      assert bool(jnp.allclose(o, r, atol=3e-2, rtol=5e-2))

  print("KERNEL_OK")
</pallas_src>

<mosaic_0001>
module attributes {stable_mosaic.version = 11 : i64} {
  func.func @_pool_kernel(%arg0: i32, %arg1: i32, %arg2: i32, %arg3: memref<2x32x256xbf16, #tpu.memory_space<vmem>>, %arg4: memref<32x1xf32, #tpu.memory_space<vmem>>, %arg5: memref<1x2x32xf32, #tpu.memory_space<vmem>>) attributes {dimension_semantics = [#tpu.dimension_semantics<parallel>, #tpu.dimension_semantics<parallel>, #tpu.dimension_semantics<arbitrary>], iteration_bounds = array<i64: 2, 1, 2>, scalar_prefetch = 0 : i64, scratch_operands = 0 : i64, tpu.core_type = #tpu.core_type<tc>, window_params = [{transform_indices = @transform_0, window_bounds = array<i64: 2, 32, 256>}, {pipeline_mode = #tpu.pipeline_mode<synchronous>, transform_indices = @transform_1, window_bounds = array<i64: 32, 1>}, {transform_indices = @transform_2, window_bounds = array<i64: 1, 2, 32>}]} {
    %c0_i32 = arith.constant 0 : i32
    %0 = arith.cmpi eq, %arg2, %c0_i32 : i32
    %1 = arith.extui %0 : i1 to i32
    %c0_i32_0 = arith.constant 0 : i32
    %2 = arith.cmpi ne, %1, %c0_i32_0 : i32
    scf.if %2 {
      %cst_15 = arith.constant 0.000000e+00 : f32
      %35 = vector.broadcast %cst_15 : f32 to vector<2x32xf32>
      %c0_16 = arith.constant 0 : index
      %c0_17 = arith.constant 0 : index
      %c0_18 = arith.constant 0 : index
      %36 = vector.load %arg5[%c0_16, %c0_17, %c0_18] : memref<1x2x32xf32, #tpu.memory_space<vmem>>, vector<1x2x32xf32>
      %37 = vector.shape_cast %36 : vector<1x2x32xf32> to vector<2x32xf32>
      %38 = vector.shape_cast %35 : vector<2x32xf32> to vector<1x2x32xf32>
      tpu.vector_store %arg5[%c0_16, %c0_17, %c0_18], %38 {strides = array<i32>} : memref<1x2x32xf32, #tpu.memory_space<vmem>>, vector<1x2x32xf32>,
    } else {
    }
    %c2_i32 = arith.constant 2 : i32
    %3 = arith.muli %arg0, %c2_i32 : i32
    %4 = arith.addi %3, %arg2 : i32
    %c0 = arith.constant 0 : index
    %c0_1 = arith.constant 0 : index
    %c0_2 = arith.constant 0 : index
    %5 = vector.load %arg3[%c0, %c0_1, %c0_2] : memref<2x32x256xbf16, #tpu.memory_space<vmem>>, vector<2x32x256xbf16>
    %6 = arith.extf %5 : vector<2x32x256xbf16> to vector<2x32x256xf32>
    %c0_3 = arith.constant 0 : index
    %c0_4 = arith.constant 0 : index
    %7 = vector.load %arg4[%c0_3, %c0_4] : memref<32x1xf32, #tpu.memory_space<vmem>>, vector<32x1xf32>
    %8 = vector.shape_cast %7 : vector<32x1xf32> to vector<1x32x1xf32>
    %9 = vector.broadcast %8 : vector<1x32x1xf32> to vector<2x32x256xf32>
    %10 = arith.addf %6, %9 : vector<2x32x256xf32>
    %cst = arith.constant 5.000000e-01 : f32
    %11 = vector.broadcast %cst : f32 to vector<2x32x256xf32>
    %12 = arith.mulf %11, %10 : vector<2x32x256xf32>
    %13 = math.tanh %12 : vector<2x32x256xf32>
    %cst_5 = arith.constant 1.000000e+00 : f32
    %14 = vector.broadcast %cst_5 : f32 to vector<2x32x256xf32>
    %15 = arith.addf %13, %14 : vector<2x32x256xf32>
    %cst_6 = arith.constant 5.000000e-01 : f32
    %16 = vector.broadcast %cst_6 : f32 to vector<2x32x256xf32>
    %17 = arith.mulf %16, %15 : vector<2x32x256xf32>
    %18 = arith.mulf %10, %17 : vector<2x32x256xf32>
    %19 = tpu.iota {dimensions = array<i32: 2>} : vector<1x1x256xi32>
    %c256_i32 = arith.constant 256 : i32
    %20 = arith.muli %4, %c256_i32 : i32
    %c729_i32 = arith.constant 729 : i32
    %21 = arith.subi %c729_i32, %20 : i32
    %22 = vector.broadcast %21 : i32 to vector<1x1x256xi32>
    %23 = arith.cmpi slt, %19, %22 : vector<1x1x256xi32>
    %cst_7 = arith.constant 0.000000e+00 : f32
    %24 = vector.shape_cast %23 : vector<1x1x256xi1> to vector<1x1x256xi1>
    %25 = vector.broadcast %24 : vector<1x1x256xi1> to vector<2x32x256xi1>
    %26 = vector.broadcast %cst_7 : f32 to vector<2x32x256xf32>
    %27 = arith.select %25, %18, %26 : vector<2x32x256xi1>, vector<2x32x256xf32>
    %c0_8 = arith.constant 0 : index
    %c0_9 = arith.constant 0 : index
    %c0_10 = arith.constant 0 : index
    %28 = vector.load %arg5[%c0_8, %c0_9, %c0_10] : memref<1x2x32xf32, #tpu.memory_space<vmem>>, vector<1x2x32xf32>
    %29 = vector.shape_cast %28 : vector<1x2x32xf32> to vector<2x32xf32>
    %cst_11 = arith.constant dense<0.000000e+00> : vector<2x32xf32>
    %30 = vector.multi_reduction <add>, %27, %cst_11 [2] : vector<2x32x256xf32> to vector<2x32xf32>
    %31 = arith.addf %29, %30 : vector<2x32xf32>
    %c0_12 = arith.constant 0 : index
    %c0_13 = arith.constant 0 : index
    %c0_14 = arith.constant 0 : index
    %32 = vector.load %arg5[%c0_12, %c0_13, %c0_14] : memref<1x2x32xf32, #tpu.memory_space<vmem>>, vector<1x2x32xf32>
    %33 = vector.shape_cast %32 : vector<1x2x32xf32> to vector<2x32xf32>
    %34 = vector.shape_cast %31 : vector<2x32xf32> to vector<1x2x32xf32>
    tpu.vector_store %arg5[%c0_12, %c0_13, %c0_14], %34 {strides = array<i32>} : memref<1x2x32xf32, #tpu.memory_space<vmem>>, vector<1x2x32xf32>,
    return
  }
  func.func @transform_0(%arg0: i32, %arg1: i32, %arg2: i32) -> (i32, i32, i32) {
    %c2_i32 = arith.constant 2 : i32
    %0 = arith.muli %arg0, %c2_i32 : i32
    %1 = arith.addi %0, %arg2 : i32
    %c2_i32_0 = arith.constant 2 : i32
    %2 = arith.minsi %1, %c2_i32_0 : i32
    %c0_i32 = arith.constant 0 : i32
    %c0_i32_1 = arith.constant 0 : i32
    return %arg1, %c0_i32, %2 : i32, i32, i32
  }
  func.func @transform_1(%arg0: i32, %arg1: i32, %arg2: i32) -> (i32, i32) {
    %c0_i32 = arith.constant 0 : i32
    %c0_i32_0 = arith.constant 0 : i32
    %c0_i32_1 = arith.constant 0 : i32
    return %c0_i32, %c0_i32_0 : i32, i32
  }
  func.func @transform_2(%arg0: i32, %arg1: i32, %arg2: i32) -> (i32, i32, i32) {
    %c0_i32 = arith.constant 0 : i32
    %c0_i32_0 = arith.constant 0 : i32
    return %arg0, %arg1, %c0_i32 : i32, i32, i32
  }
}

module attributes {stable_mosaic.version = 11 : i64} {
  func.func @_epilogue_kernel(%arg0: memref<2x2x32xf32, #tpu.memory_space<vmem>>, %arg1: memref<32x1280xf32, #tpu.memory_space<vmem>>, %arg2: memref<1x1280xf32, #tpu.memory_space<vmem>>, %arg3: memref<1280x12xf32, #tpu.memory_space<vmem>>, %arg4: memref<1x12xf32, #tpu.memory_space<vmem>>, %arg5: memref<2x12xf32, #tpu.memory_space<vmem>>) attributes {dimension_semantics = [], scalar_prefetch = 0 : i64, scratch_operands = 0 : i64, tpu.core_type = #tpu.core_type<tc>} {
    %c0 = arith.constant 0 : index
    %c0_0 = arith.constant 0 : index
    %c0_1 = arith.constant 0 : index
    %0 = vector.load %arg0[%c0, %c0_0, %c0_1] : memref<2x2x32xf32, #tpu.memory_space<vmem>>, vector<2x2x32xf32>
    %cst = arith.constant dense<0.000000e+00> : vector<2x32xf32>
    %1 = vector.multi_reduction <add>, %0, %cst [0] : vector<2x2x32xf32> to vector<2x32xf32>
    %cst_2 = arith.constant 0.00137174211 : f32
    %2 = vector.broadcast %cst_2 : f32 to vector<2x32xf32>
    %3 = arith.mulf %1, %2 : vector<2x32xf32>
    %c0_3 = arith.constant 0 : index
    %c0_4 = arith.constant 0 : index
    %4 = vector.load %arg1[%c0_3, %c0_4] : memref<32x1280xf32, #tpu.memory_space<vmem>>, vector<32x1280xf32>
    %cst_5 = arith.constant dense<0.000000e+00> : vector<2x1280xf32>
    %5 = tpu.matmul %3, %4, %cst_5 {dimension_numbers = #tpu.dot_dimension_numbers<[1], [0], [0], [1], [0, 0, 1, 1], [], []>} : vector<2x32xf32>, vector<32x1280xf32>, vector<2x1280xf32> -> vector<2x1280xf32>
    %c0_6 = arith.constant 0 : index
    %c0_7 = arith.constant 0 : index
    %6 = vector.load %arg2[%c0_6, %c0_7] : memref<1x1280xf32, #tpu.memory_space<vmem>>, vector<1x1280xf32>
    %7 = vector.broadcast %6 : vector<1x1280xf32> to vector<2x1280xf32>
    %8 = arith.addf %5, %7 : vector<2x1280xf32>
    %cst_8 = arith.constant 5.000000e-01 : f32
    %9 = vector.broadcast %cst_8 : f32 to vector<2x1280xf32>
    %10 = arith.mulf %9, %8 : vector<2x1280xf32>
    %11 = math.tanh %10 : vector<2x1280xf32>
    %cst_9 = arith.constant 1.000000e+00 : f32
    %12 = vector.broadcast %cst_9 : f32 to vector<2x1280xf32>
    %13 = arith.addf %11, %12 : vector<2x1280xf32>
    %cst_10 = arith.constant 5.000000e-01 : f32
    %14 = vector.broadcast %cst_10 : f32 to vector<2x1280xf32>
    %15 = arith.mulf %14, %13 : vector<2x1280xf32>
    %16 = arith.mulf %8, %15 : vector<2x1280xf32>
    %c0_11 = arith.constant 0 : index
    %c0_12 = arith.constant 0 : index
    %17 = vector.load %arg3[%c0_11, %c0_12] : memref<1280x12xf32, #tpu.memory_space<vmem>>, vector<1280x12xf32>
    %cst_13 = arith.constant dense<0.000000e+00> : vector<2x12xf32>
    %18 = tpu.matmul %16, %17, %cst_13 {dimension_numbers = #tpu.dot_dimension_numbers<[1], [0], [0], [1], [0, 0, 1, 1], [], []>} : vector<2x1280xf32>, vector<1280x12xf32>, vector<2x12xf32> -> vector<2x12xf32>
    %c0_14 = arith.constant 0 : index
    %c0_15 = arith.constant 0 : index
    %19 = vector.load %arg4[%c0_14, %c0_15] : memref<1x12xf32, #tpu.memory_space<vmem>>, vector<1x12xf32>
    %20 = vector.broadcast %19 : vector<1x12xf32> to vector<2x12xf32>
    %21 = arith.addf %18, %20 : vector<2x12xf32>
    %22 = tpu.iota {dimensions = array<i32: 1>} : vector<2x12xi32>
    %c2_i32 = arith.constant 2 : i32
    %23 = vector.broadcast %c2_i32 : i32 to vector<2x12xi32>
    %24 = arith.cmpi eq, %22, %23 : vector<2x12xi32>
    %cst_16 = arith.constant 5.000000e-01 : f32
    %25 = vector.broadcast %cst_16 : f32 to vector<2x12xf32>
    %26 = arith.mulf %25, %21 : vector<2x12xf32>
    %27 = math.tanh %26 : vector<2x12xf32>
    %cst_17 = arith.constant 1.000000e+00 : f32
    %28 = vector.broadcast %cst_17 : f32 to vector<2x12xf32>
    %29 = arith.addf %27, %28 : vector<2x12xf32>
    %cst_18 = arith.constant 5.000000e-01 : f32
    %30 = vector.broadcast %cst_18 : f32 to vector<2x12xf32>
    %31 = arith.mulf %30, %29 : vector<2x12xf32>
    %32 = arith.select %24, %31, %21 : vector<2x12xi1>, vector<2x12xf32>
    %c0_19 = arith.constant 0 : index
    %c0_20 = arith.constant 0 : index
    %33 = vector.load %arg5[%c0_19, %c0_20] : memref<2x12xf32, #tpu.memory_space<vmem>>, vector<2x12xf32>
    tpu.vector_store %arg5[%c0_19, %c0_20], %32 {strides = array<i32>} : memref<2x12xf32, #tpu.memory_space<vmem>>, vector<2x12xf32>,
    return
  }
}

</mosaic_0001>

<llo_original>
// kernel: efficientnet_forward.2
$region0: #{efficientnet_forward.2}
  #allocation0 [shape = 'u32[]', space=smem, size = 0x4, offset = 0x4, fixed_abs, tag = 'smem constant byte address 0x4 - core index']
  #allocation1 [shape = 'u32[144,128]{1,0:T(1,128)}', space=vmem, size = 0x12000, scoped, tag = 'internal scratch']
  %s0 = inlined_call_operand.vmem [shape: bf16[2,32,729], index: 0, kind: input, shape index: {}]
  %s1 = inlined_call_operand.vmem [shape: f32[32,1], index: 1, kind: input, shape index: {}]
  %s2 = inlined_call_operand.vmem [shape: f32[2,2,32], index: 2, kind: output, shape index: {}]
  %s3 = sld [smem:[#allocation0]]
  $region83: #{efficientnet_forward.2} parent=0
    _
  %s5 = ssub.s32 1, %s3
  %s6 = scalar_select 0, %s5, %s3
  $region1: #{efficientnet_forward.2} parent=0
    #allocation2 [shape = 'u8[65536]{0}', space=vmem, size = 0x10000, scoped, tag = 'input window, operand 0']
    loop: start=0, step=1, limit=6
    $region2: #{efficientnet_forward.2} parent=1 // loop_pre_header
      _
    $region3: #{efficientnet_forward.2} parent=1 // loop_header
      %s8 = sphi 0, %s12
      %p9 = scmp.ge.s32.totalorder %s8, 6
      %s15 = sphi 0, %s34
      %s16 = sphi 0, %s30
      %s17 = sphi 0, %s26
      %s18 = sphi 0, %s15
      %s19 = sphi 0, %s16
      %s20 = sphi 0, %s17
      %s21 = sphi 0, %s18
      %s22 = sphi 0, %s19
      %s23 = sphi 0, %s20
      %s47 = sphi 0, %s49
      %s50 = sphi 0, %s47
      %s51 = sphi 0, %s50
      %s67 = sphi 0, %s51
      %s71 = sphi 0, %s71
      %s73 = sphi 0, %s71
      %s74 = sphi 0, %s73
      %s88 = sphi 0, %s74
      %s96 = sphi 0, %s98
      %s99 = sphi 0, %s96
      %s100 = sphi 0, %s99
      %s116 = sphi 0, %s100
    $region4: #{efficientnet_forward.2} parent=1 // loop_header_branch
      %11 = sbr.rel (%p9) target = $region8
    $region5: #{efficientnet_forward.2} parent=1 // loop_body
      %s13 = ssub.s32 %s8, 1
      %s14 = ssub.s32 %s8, 2
      %s24 = sadd.s32 1, %s17
      %p25 = scmp.ge.s32.totalorder %s24, 2
      %s26 = scalar_select %p25, 0, %s24
      %s27 = sadd.s32 1, %s16
      %s28 = scalar_select %p25, %s27, %s16
      %p29 = scmp.ge.s32.totalorder %s28, 1
      %s30 = scalar_select %p29, 0, %s28
      %s31 = sadd.s32 1, %s15
      %s32 = scalar_select %p29, %s31, %s15
      %p33 = scmp.ge.s32.totalorder %s32, 2
      %s34 = scalar_select %p33, 0, %s32
      %s35 = smul.u32 %s15, 2
      %s36 = sadd.s32 %s35, %s17
      %p37 = scmp.lt.s32.totalorder %s36, 2
      %s38 = scalar_select %p37, %s36, 2
      %s39 = smul.u32 %s34, 2
      %s40 = sadd.s32 %s39, %s26
      %p41 = scmp.lt.s32.totalorder %s40, 2
      %s42 = scalar_select %p41, %s40, 2
      %s43 = ssub.s32 %s16, %s30
      %s44 = ssub.s32 %s38, %s42
      %s45 = sor.u32 %s43, %s44
      %p46 = scmp.eq.s32.totalorder %s45, 0
      %s48 = sadd.s32 %s47, 1
      %s49 = scalar_select %p46, %s47, %s48
      %p52 = pneg %p46
      %p53 = scmp.eq.s32.totalorder %s8, 3
      %p54 = por %p52, %p53
      %p55 = scmp.ne.s32.totalorder %s47, %s50
      %p56 = scmp.eq.s32.totalorder %s8, 0
      %p57 = por %p55, %p56
      %p58 = scmp.ne.s32.totalorder %s47, %s50
      %p59 = scmp.eq.s32.totalorder %s13, 3
      %p60 = por %p58, %p59
      %p61 = scmp.ne.s32.totalorder %s50, %s51
      %p62 = scmp.eq.s32.totalorder %s13, 0
      %p63 = por %p61, %p62
      %p64 = scmp.ne.s32.totalorder %s50, %s51
      %p65 = scmp.eq.s32.totalorder %s14, 3
      %p66 = por %p64, %p65
      %p68 = scmp.ne.s32.totalorder %s51, %s67
      %p69 = scmp.eq.s32.totalorder %s14, 0
      %p70 = por %p68, %p69
      %s72 = sadd.s32 %s71, 1
      %p75 = scmp.eq.s32.totalorder %s8, 3
      %p76 = scmp.ne.s32.totalorder %s71, %s73
      %p77 = scmp.eq.s32.totalorder %s8, 0
      %p78 = por %p76, %p77
      %p79 = scmp.ne.s32.totalorder %s71, %s73
      %p80 = scmp.eq.s32.totalorder %s13, 3
      %p81 = por %p79, %p80
      %p82 = scmp.ne.s32.totalorder %s73, %s74
      %p83 = scmp.eq.s32.totalorder %s13, 0
      %p84 = por %p82, %p83
      %p85 = scmp.ne.s32.totalorder %s73, %s74
      %p86 = scmp.eq.s32.totalorder %s14, 3
      %p87 = por %p85, %p86
      %p89 = scmp.ne.s32.totalorder %s74, %s88
      %p90 = scmp.eq.s32.totalorder %s14, 0
      %p91 = por %p89, %p90
      %s92 = ssub.s32 %s15, %s34
      %s93 = ssub.s32 %s16, %s30
      %s94 = sor.u32 %s92, %s93
      %p95 = scmp.eq.s32.totalorder %s94, 0
      %s97 = sadd.s32 %s96, 1
      %s98 = scalar_select %p95, %s96, %s97
      %p101 = pneg %p95
      %p102 = scmp.eq.s32.totalorder %s8, 3
      %p103 = por %p101, %p102
      %p104 = scmp.ne.s32.totalorder %s96, %s99
      %p105 = scmp.eq.s32.totalorder %s8, 0
      %p106 = por %p104, %p105
      %p107 = scmp.ne.s32.totalorder %s96, %s99
      %p108 = scmp.eq.s32.totalorder %s13, 3
      %p109 = por %p107, %p108
      %p110 = scmp.ne.s32.totalorder %s99, %s100
      %p111 = scmp.eq.s32.totalorder %s13, 0
      %p112 = por %p110, %p111
      %p113 = scmp.ne.s32.totalorder %s99, %s100
      %p114 = scmp.eq.s32.totalorder %s14, 3
      %p115 = por %p113, %p114
      %p117 = scmp.ne.s32.totalorder %s100, %s116
      %p118 = scmp.eq.s32.totalorder %s14, 0
      %p119 = por %p117, %p118
      %p120 = scmp.le.s32.totalorder 1, %s8
      %p121 = scmp.lt.s32.totalorder %s8, 5
      %p122 = pnand %p120, %p121
      %p123 = pneg %p122
      // Predicated region
      $region9: #{efficientnet_forward.2} parent=5 // pred_check
        _
      $region10: #{efficientnet_forward.2} parent=5 // pred_check_branch
        %125 = sbr.rel (%p122) target = $region12
      $region11: #{efficientnet_forward.2} parent=5 // pred_region
        %s126 = ssub.s32 %s8, 1
        // Predicated region
        $region13: #{efficientnet_forward.2} parent=11 // pred_check
          %p127 = pneg %p84
        $region14: #{efficientnet_forward.2} parent=11 // pred_check_branch
          %129 = sbr.rel (%p127) target = $region16
        $region15: #{efficientnet_forward.2} parent=11 // pred_region
          _
        $region16: #{efficientnet_forward.2} parent=11 // pred_fallthru
          _
      $region12: #{efficientnet_forward.2} parent=5 // pred_fallthru
        _
      %p130 = scmp.lt.s32.totalorder %s8, 4
      // Predicated region
      $region17: #{efficientnet_forward.2} parent=5 // pred_check
        %p131 = pneg %p130
      $region18: #{efficientnet_forward.2} parent=5 // pred_check_branch
        %133 = sbr.rel (%p131) target = $region20
      $region19: #{efficientnet_forward.2} parent=5 // pred_region
        // Predicated region
        $region21: #{efficientnet_forward.2} parent=19 // pred_check
          %p134 = pneg %p57
        $region22: #{efficientnet_forward.2} parent=19 // pred_check_branch
          %136 = sbr.rel (%p134) target = $region24
        $region23: #{efficientnet_forward.2} parent=19 // pred_region
          %s137 = sand.u32 %s47, 1
          %s138 = sand.u32 %s47, 1
          %s139 = smul.addr %s138, 64
          %s140 = scalar_lea.vmem [#allocation2], %s139
          %s141 = smul.u32 %s15, 2
          %s142 = sadd.s32 %s141, %s17
          %p143 = scmp.lt.s32.totalorder %s142, 2
          %s144 = scalar_select %p143, %s142, 2
          %s145 = smul.u32 2, %s16
          %s146 = smul.u32 2, %s144
          %s147 = smul.addr %s145, 24
          %s148 = sadd.s32 %s146, %s147
          %s149 = smul.addr %s148, 4
          %s150 = scalar_lea.vmem %s0, %s149
          // Predicated region
          $region25: #{efficientnet_forward.2} parent=23 // pred_check
            _
          $region26: #{efficientnet_forward.2} parent=23 // pred_check_branch
            %152 = sbr.rel (0) target = $region28
          $region27: #{efficientnet_forward.2} parent=23 // pred_region
            // Predicated region
            $region29: #{efficientnet_forward.2} parent=27 // pred_check
              _
            $region30: #{efficientnet_forward.2} parent=27 // pred_check_branch
              %154 = sbr.rel (0) target = $region32
            $region31: #{efficientnet_forward.2} parent=27 // pred_region
              // Predicated region
              $region44: #{efficientnet_forward.2} parent=31 // pred_check
                _
              $region45: #{efficientnet_forward.2} parent=31 // pred_check_branch
                %184 = sbr.rel (0) target = $region47
              $region46: #{efficientnet_forward.2} parent=31 // pred_region
                loop: start=0, step=1, limit=1
                $region48: #{efficientnet_forward.2} parent=46 // loop_pre_header
                  _
                $region49: #{efficientnet_forward.2} parent=46 // loop_header
                  %s186 = sphi 0, %s190
                  %p187 = scmp.ge.s32.totalorder %s186, 1
                  %s191 = sphi %s150, %s150
                  %s192 = sphi %s140, %s140
                $region50: #{efficientnet_forward.2} parent=46 // loop_header_branch
                  %189 = sbr.rel (%p187) target = $region54
                $region51: #{efficientnet_forward.2} parent=46 // loop_body
                  %v193 = vld [vmem:[%s191] sm:$0xff]
                  %194 = vst [vmem:[%s192] sm:$0xff] %v193
                  %v195 = vld [vmem:[%s191 + $0x18] sm:$0xff]
                  %196 = vst [vmem:[%s192 + $0x8] sm:$0xff] %v195
                  %v197 = vld [vmem:[%s191 + $0x30] sm:$0xff]
                  %198 = vst [vmem:[%s192 + $0x10] sm:$0xff] %v197
                  %v199 = vld [vmem:[%s191 + $0x48] sm:$0xff]
                  %200 = vst [vmem:[%s192 + $0x18] sm:$0xff] %v199
                  %v201 = vld [vmem:[%s191 + $0x60] sm:$0xff]
                  %202 = vst [vmem:[%s192 + $0x20] sm:$0xff] %v201
                  %v203 = vld [vmem:[%s191 + $0x78] sm:$0xff]
                  %204 = vst [vmem:[%s192 + $0x28] sm:$0xff] %v203
                  %v205 = vld [vmem:[%s191 + $0x90] sm:$0xff]
                  %206 = vst [vmem:[%s192 + $0x30] sm:$0xff] %v205
                  %v207 = vld [vmem:[%s191 + $0xa8] sm:$0xff]
                  %208 = vst [vmem:[%s192 + $0x38] sm:$0xff] %v207
                $region52: #{efficientnet_forward.2} parent=46 // loop_footer
                  %s190 = sadd.s32 1, %s186
                $region53: #{efficientnet_forward.2} parent=46 // loop_footer_branch
                  %185 = sbr.rel target = $region49
                $region54: #{efficientnet_forward.2} parent=46 // loop_exit
                  _
              $region47: #{efficientnet_forward.2} parent=31 // pred_fallthru
                _
              // Predicated region
              $region55: #{efficientnet_forward.2} parent=31 // pred_check
                _
              $region56: #{efficientnet_forward.2} parent=31 // pred_check_branch
                %210 = sbr.rel target = $region58
              $region57: #{efficientnet_forward.2} parent=31 // pred_region
                _
              $region58: #{efficientnet_forward.2} parent=31 // pred_fallthru
                _
            $region32: #{efficientnet_forward.2} parent=27 // pred_fallthru
              _
            // Predicated region
            $region33: #{efficientnet_forward.2} parent=27 // pred_check
              _
            $region34: #{efficientnet_forward.2} parent=27 // pred_check_branch
              %156 = sbr.rel target = $region36
            $region35: #{efficientnet_forward.2} parent=27 // pred_region
              %s158 = ssub.s32 256, 1
              loop: start=0, step=1, limit=1
              $region37: #{efficientnet_forward.2} parent=35 // loop_pre_header
                _
              $region38: #{efficientnet_forward.2} parent=35 // loop_header
                %s160 = sphi 0, %s164
                %p161 = scmp.ge.s32.totalorder %s160, 1
                %s165 = sphi %s150, %s150
                %s166 = sphi %s140, %s140
              $region39: #{efficientnet_forward.2} parent=35 // loop_header_branch
                %163 = sbr.rel (%p161) target = $region43
              $region40: #{efficientnet_forward.2} parent=35 // loop_body
                %v167 = vld [vmem:[%s165] sm:%s158]
                %168 = vst [vmem:[%s166] sm:%s158] %v167
                %v169 = vld [vmem:[%s165 + $0x18] sm:%s158]
                %170 = vst [vmem:[%s166 + $0x8] sm:%s158] %v169
                %v171 = vld [vmem:[%s165 + $0x30] sm:%s158]
                %172 = vst [vmem:[%s166 + $0x10] sm:%s158] %v171
                %v173 = vld [vmem:[%s165 + $0x48] sm:%s158]
                %174 = vst [vmem:[%s166 + $0x18] sm:%s158] %v173
                %v175 = vld [vmem:[%s165 + $0x60] sm:%s158]
                %176 = vst [vmem:[%s166 + $0x20] sm:%s158] %v175
                %v177 = vld [vmem:[%s165 + $0x78] sm:%s158]
                %178 = vst [vmem:[%s166 + $0x28] sm:%s158] %v177
                %v179 = vld [vmem:[%s165 + $0x90] sm:%s158]
                %180 = vst [vmem:[%s166 + $0x30] sm:%s158] %v179
                %v181 = vld [vmem:[%s165 + $0xa8] sm:%s158]
                %182 = vst [vmem:[%s166 + $0x38] sm:%s158] %v181
              $region41: #{efficientnet_forward.2} parent=35 // loop_footer
                %s164 = sadd.s32 1, %s160
              $region42: #{efficientnet_forward.2} parent=35 // loop_footer_branch
                %159 = sbr.rel target = $region38
              $region43: #{efficientnet_forward.2} parent=35 // loop_exit
                _
            $region36: #{efficientnet_forward.2} parent=27 // pred_fallthru
              _
          $region28: #{efficientnet_forward.2} parent=23 // pred_fallthru
            _
          %211 = vnop
        $region24: #{efficientnet_forward.2} parent=19 // pred_fallthru
          _
      $region20: #{efficientnet_forward.2} parent=5 // pred_fallthru
        _
      %p212 = scmp.le.s32.totalorder 1, %s8
      %p213 = scmp.lt.s32.totalorder %s8, 5
      %p214 = pnand %p212, %p213
      %p215 = pneg %p214
      // Predicated region
      $region59: #{efficientnet_forward.2} parent=5 // pred_check
        _
      $region60: #{efficientnet_forward.2} parent=5 // pred_check_branch
        %217 = sbr.rel (%p214) target = $region62
      $region61: #{efficientnet_forward.2} parent=5 // pred_region
        %s218 = ssub.s32 %s8, 1
        %s219 = sand.u32 %s50, 1
        %s220 = sand.u32 %s50, 1
        %s221 = smul.addr %s220, 64
        %s222 = scalar_lea.vmem [#allocation2], %s221
        // Predicated region
        $region63: #{efficientnet_forward.2} parent=61 // pred_check
          %p223 = pneg %p63
        $region64: #{efficientnet_forward.2} parent=61 // pred_check_branch
          %225 = sbr.rel (%p223) target = $region66
        $region65: #{efficientnet_forward.2} parent=61 // pred_region
          _
        $region66: #{efficientnet_forward.2} parent=61 // pred_fallthru
          _
        %s226 = sand.u32 %s50, 1
        %s227 = sand.u32 %s50, 1
        %s228 = smul.addr %s227, 64
        %s229 = scalar_lea.vmem [#allocation2], %s228
        %p230 = pneg %p63
        %p231 = pneg %p60
        %p232 = pneg %p84
        %p233 = pneg %p81
        %p234 = pneg %p112
        %p235 = pneg %p109
        %p236 = scmp.lt.s32.totalorder %s18, 1
        %s237 = scalar_select %p236, %s18, 1
        %p238 = scmp.lt.s32.totalorder %s19, 0
        %s239 = scalar_select %p238, %s19, 0
        %s240 = sadd.s32 %s239, %s237
        %s241 = smul.addr %s240, 2
        %s242 = scalar_lea.vmem %s2, %s241
        %s243 = smul.u32 %s18, 2
        %s244 = sadd.s32 %s243, %s20
        %p245 = scmp.lt.s32.totalorder %s244, 2
        %s246 = scalar_select %p245, %s244, 2
        %s247 = smul.u32 2, %s19
        %s248 = smul.u32 2, %s246
        %p249 = scmp.lt.s32.totalorder %s18, 1
        %s250 = scalar_select %p249, %s18, 1
        %p251 = scmp.lt.s32.totalorder %s19, 0
        %s252 = scalar_select %p251, %s19, 0
        %s253 = sadd.s32 %s252, %s250
        %s254 = smul.addr %s253, 2
        %s255 = scalar_lea.vmem %s2, %s254
        %p256 = scmp.eq.s32.totalorder %s20, 0
        // Predicated region
        $region67: #{efficientnet_forward.2} parent=61 // pred_check
          %p257 = pneg %p256
        $region68: #{efficientnet_forward.2} parent=61 // pred_check_branch
          %259 = sbr.rel (%p257) target = $region70
        $region69: #{efficientnet_forward.2} parent=61 // pred_region
          %vm260 = vcmask 254976
          %261 = vst.msk [vmem:[%s255] sm:$0x3] %vm260, 0.0
        $region70: #{efficientnet_forward.2} parent=61 // pred_fallthru
          _
        %s262 = smul.u32 %s18, 2
        %s263 = sadd.s32 %s262, %s20
        %v264 = vld [vmem:[%s222] sm:$0xff]
        %v265 = vld [vmem:[%s222 + $0x8] sm:$0xff]
        %v266 = vld [vmem:[%s222 + $0x10] sm:$0xff]
        %v267 = vld [vmem:[%s222 + $0x18] sm:$0xff]
        %v268 = vld [vmem:[%s222 + $0x20] sm:$0xff]
        %v269 = vld [vmem:[%s222 + $0x28] sm:$0xff]
        %v270 = vld [vmem:[%s222 + $0x30] sm:$0xff]
        %v271 = vld [vmem:[%s222 + $0x38] sm:$0xff]
        %v272 = vunpack.c.l.bf16 %v264
        %v273 = vunpack.c.h.bf16 %v264
        %v274 = vunpack.c.l.bf16 %v265
        %v275 = vunpack.c.h.bf16 %v265
        %v276 = vunpack.c.l.bf16 %v266
        %v277 = vunpack.c.h.bf16 %v266
        %v278 = vunpack.c.l.bf16 %v267
        %v279 = vunpack.c.h.bf16 %v267
        %v280 = vunpack.c.l.bf16 %v268
        %v281 = vunpack.c.h.bf16 %v268
        %v282 = vunpack.c.l.bf16 %v269
        %v283 = vunpack.c.h.bf16 %v269
        %v284 = vunpack.c.l.bf16 %v270
        %v285 = vunpack.c.h.bf16 %v270
        %v286 = vunpack.c.l.bf16 %v271
        %v287 = vunpack.c.h.bf16 %v271
        %v288 = vld [vmem:[%s1] sm:$0xff]
        %v289 = vld [vmem:[%s1 + $0x8] sm:$0xff]
        %v290 = vld [vmem:[%s1 + $0x10] sm:$0xff]
        %v291 = vld [vmem:[%s1 + $0x18] sm:$0xff]
        %293 = vset.pattern.permute.xlu0 0
        %294 = vperm.xlu0 %293, %v288
        %v295 = vpop.permute.xlu0 %294
        %298 = vset.pattern.permute.xlu0 0
        %299 = vperm.xlu0 %298, %v289
        %v300 = vpop.permute.xlu0 %299
        %303 = vset.pattern.permute.xlu0 0
        %304 = vperm.xlu0 %303, %v290
        %v305 = vpop.permute.xlu0 %304
        %308 = vset.pattern.permute.xlu0 0
        %309 = vperm.xlu0 %308, %v291
        %v310 = vpop.permute.xlu0 %309
        %v312 = vadd.f32 %v272, %v295
        %v313 = vadd.f32 %v273, %v295
        %v314 = vadd.f32 %v274, %v300
        %v315 = vadd.f32 %v275, %v300
        %v316 = vadd.f32 %v276, %v305
        %v317 = vadd.f32 %v277, %v305
        %v318 = vadd.f32 %v278, %v310
        %v319 = vadd.f32 %v279, %v310
        %v320 = vadd.f32 %v280, %v295
        %v321 = vadd.f32 %v281, %v295
        %v322 = vadd.f32 %v282, %v300
        %v323 = vadd.f32 %v283, %v300
        %v324 = vadd.f32 %v284, %v305
        %v325 = vadd.f32 %v285, %v305
        %v326 = vadd.f32 %v286, %v310
        %v327 = vadd.f32 %v287, %v310
        %v328 = vmul.f32 %v312, 0.5
        %v329 = vmul.f32 %v313, 0.5
        %v330 = vmul.f32 %v314, 0.5
        %v331 = vmul.f32 %v315, 0.5
        %v332 = vmul.f32 %v316, 0.5
        %v333 = vmul.f32 %v317, 0.5
        %v334 = vmul.f32 %v318, 0.5
        %v335 = vmul.f32 %v319, 0.5
        %v336 = vmul.f32 %v320, 0.5
        %v337 = vmul.f32 %v321, 0.5
        %v338 = vmul.f32 %v322, 0.5
        %v339 = vmul.f32 %v323, 0.5
        %v340 = vmul.f32 %v324, 0.5
        %v341 = vmul.f32 %v325, 0.5
        %v342 = vmul.f32 %v326, 0.5
        %v343 = vmul.f32 %v327, 0.5
        %v344 = vtanh.pop %v328
        %v345 = vtanh.pop %v329
        %v346 = vtanh.pop %v330
        %v347 = vtanh.pop %v331
        %v348 = vtanh.pop %v332
        %v349 = vtanh.pop %v333
        %v350 = vtanh.pop %v334
        %v351 = vtanh.pop %v335
        %v352 = vtanh.pop %v336
        %v353 = vtanh.pop %v337
        %v354 = vtanh.pop %v338
        %v355 = vtanh.pop %v339
        %v356 = vtanh.pop %v340
        %v357 = vtanh.pop %v341
        %v358 = vtanh.pop %v342
        %v359 = vtanh.pop %v343
        %v360 = vadd.f32 %v344, 1.0
        %v361 = vadd.f32 %v345, 1.0
        %v362 = vadd.f32 %v346, 1.0
        %v363 = vadd.f32 %v347, 1.0
        %v364 = vadd.f32 %v348, 1.0
        %v365 = vadd.f32 %v349, 1.0
        %v366 = vadd.f32 %v350, 1.0
        %v367 = vadd.f32 %v351, 1.0
        %v368 = vadd.f32 %v352, 1.0
        %v369 = vadd.f32 %v353, 1.0
        %v370 = vadd.f32 %v354, 1.0
        %v371 = vadd.f32 %v355, 1.0
        %v372 = vadd.f32 %v356, 1.0
        %v373 = vadd.f32 %v357, 1.0
        %v374 = vadd.f32 %v358, 1.0
        %v375 = vadd.f32 %v359, 1.0
        %v376 = vmul.f32 %v360, 0.5
        %v377 = vmul.f32 %v361, 0.5
        %v378 = vmul.f32 %v362, 0.5
        %v379 = vmul.f32 %v363, 0.5
        %v380 = vmul.f32 %v364, 0.5
        %v381 = vmul.f32 %v365, 0.5
        %v382 = vmul.f32 %v366, 0.5
        %v383 = vmul.f32 %v367, 0.5
        %v384 = vmul.f32 %v368, 0.5
        %v385 = vmul.f32 %v369, 0.5
        %v386 = vmul.f32 %v370, 0.5
        %v387 = vmul.f32 %v371, 0.5
        %v388 = vmul.f32 %v372, 0.5
        %v389 = vmul.f32 %v373, 0.5
        %v390 = vmul.f32 %v374, 0.5
        %v391 = vmul.f32 %v375, 0.5
        %v392 = vmul.f32 %v312, %v376
        %v393 = vmul.f32 %v313, %v377
        %v394 = vmul.f32 %v314, %v378
        %v395 = vmul.f32 %v315, %v379
        %v396 = vmul.f32 %v316, %v380
        %v397 = vmul.f32 %v317, %v381
        %v398 = vmul.f32 %v318, %v382
        %v399 = vmul.f32 %v319, %v383
        %v400 = vmul.f32 %v320, %v384
        %v401 = vmul.f32 %v321, %v385
        %v402 = vmul.f32 %v322, %v386
        %v403 = vmul.f32 %v323, %v387
        %v404 = vmul.f32 %v324, %v388
        %v405 = vmul.f32 %v325, %v389
        %v406 = vmul.f32 %v326, %v390
        %v407 = vmul.f32 %v327, %v391
        %v408 = vlaneseq
        %v409 = vand.u32 %v408, 127
        %v410 = vadd.s32 %v409, 128
        %s411 = smul.u32 %s263, 256
        %s412 = ssub.s32 729, %s411
        %v413 = vstv %s412
        %vm414 = vcmp.lt.s32.totalorder %v409, %v413
        %vm415 = vcmp.lt.s32.totalorder %v410, %v413
        %v416 = vsel %vm414, 1, 0
        %v417 = vsel %vm415, 1, 0
        %vm418 = vcmp.eq.s32.totalorder %v416, 1
        %vm419 = vcmp.eq.s32.totalorder %v417, 1
        %v420 = vsel %vm418, %v392, 0.0
        %v421 = vsel %vm419, %v393, 0.0
        %v422 = vsel %vm418, %v394, 0.0
        %v423 = vsel %vm419, %v395, 0.0
        %v424 = vsel %vm418, %v396, 0.0
        %v425 = vsel %vm419, %v397, 0.0
        %v426 = vsel %vm418, %v398, 0.0
        %v427 = vsel %vm419, %v399, 0.0
        %v428 = vsel %vm418, %v400, 0.0
        %v429 = vsel %vm419, %v401, 0.0
        %v430 = vsel %vm418, %v402, 0.0
        %v431 = vsel %vm419, %v403, 0.0
        %v432 = vsel %vm418, %v404, 0.0
        %v433 = vsel %vm419, %v405, 0.0
        %v434 = vsel %vm418, %v406, 0.0
        %v435 = vsel %vm419, %v407, 0.0
        %v436 = vld [vmem:[%s255] sm:$0x3]
        %v437 = vadd.f32 %v420, %v421
        %438 = vadd.xlane.f32.xlu0 %v437
        %v439 = vpop.xlane.xlu0 %438
        %v440 = vadd.f32 %v422, %v423
        %441 = vadd.xlane.f32.xlu0 %v440
        %v442 = vpop.xlane.xlu0 %441
        %v443 = vadd.f32 %v424, %v425
        %444 = vadd.xlane.f32.xlu0 %v443
        %v445 = vpop.xlane.xlu0 %444
        %v446 = vadd.f32 %v426, %v427
        %447 = vadd.xlane.f32.xlu0 %v446
        %v448 = vpop.xlane.xlu0 %447
        %v449 = vadd.f32 %v428, %v429
        %450 = vadd.xlane.f32.xlu0 %v449
        %v451 = vpop.xlane.xlu0 %450
        %v452 = vadd.f32 %v430, %v431
        %453 = vadd.xlane.f32.xlu0 %v452
        %v454 = vpop.xlane.xlu0 %453
        %v455 = vadd.f32 %v432, %v433
        %456 = vadd.xlane.f32.xlu0 %v455
        %v457 = vpop.xlane.xlu0 %456
        %v458 = vadd.f32 %v434, %v435
        %459 = vadd.xlane.f32.xlu0 %v458
        %v460 = vpop.xlane.xlu0 %459
        %v469 = vlaneseq
        %v470 = vshrl.u32 %v469, 7
        %v471 = vsub.s32 %v409, %v470
        %v472 = vrot.slane %v439, %v471
        %v473 = vadd.s32 %v409, 4294967288
        %v474 = vlaneseq
        %v475 = vshrl.u32 %v474, 7
        %v476 = vsub.s32 %v473, %v475
        %v477 = vrot.slane %v442, %v476
        %vm478 = vcmask 130112
        %v479 = vsel %vm478, %v477, %v472
        %v480 = vadd.s32 %v409, 4294967280
        %v481 = vlaneseq
        %v482 = vshrl.u32 %v481, 7
        %v483 = vsub.s32 %v480, %v482
        %v484 = vrot.slane %v445, %v483
        %vm485 = vcmask 195712
        %v486 = vsel %vm485, %v484, %v479
        %v487 = vadd.s32 %v409, 4294967272
        %v488 = vlaneseq
        %v489 = vshrl.u32 %v488, 7
        %v490 = vsub.s32 %v487, %v489
        %v491 = vrot.slane %v448, %v490
        %vm492 = vcmask 261312
        %v493 = vsel %vm492, %v491, %v486
        %v494 = vlaneseq
        %v495 = vshrl.u32 %v494, 7
        %v496 = vsub.s32 %v409, %v495
        %v497 = vrot.slane %v451, %v496
        %v498 = vlaneseq
        %v499 = vshrl.u32 %v498, 7
        %v500 = vsub.s32 %v473, %v499
        %v501 = vrot.slane %v454, %v500
        %v502 = vsel %vm478, %v501, %v497
        %v503 = vlaneseq
        %v504 = vshrl.u32 %v503, 7
        %v505 = vsub.s32 %v480, %v504
        %v506 = vrot.slane %v457, %v505
        %v507 = vsel %vm485, %v506, %v502
        %v508 = vlaneseq
        %v509 = vshrl.u32 %v508, 7
        %v510 = vsub.s32 %v487, %v509
        %v511 = vrot.slane %v460, %v510
        %v512 = vsel %vm492, %v511, %v507
        %vm513 = vcmask 1041409
        %v514 = vsel %vm513, %v512, %v493
        %v516 = vadd.f32 %v436, %v514
        %vm517 = vcmask 254976
        %518 = vst.msk [vmem:[%s255] sm:$0x3] %vm517, %v516
        %p519 = scmp.lt.s32.totalorder %s18, 1
        %s520 = scalar_select %p519, %s18, 1
        %p521 = scmp.lt.s32.totalorder %s19, 0
        %s522 = scalar_select %p521, %s19, 0
        %s523 = sadd.s32 %s522, %s520
        %s524 = smul.addr %s523, 2
        %s525 = scalar_lea.vmem %s2, %s524
        // Predicated region
        $region71: #{efficientnet_forward.2} parent=61 // pred_check
          %p526 = pneg %p109
        $region72: #{efficientnet_forward.2} parent=61 // pred_check_branch
          %528 = sbr.rel (%p526) target = $region74
        $region73: #{efficientnet_forward.2} parent=61 // pred_region
          _
        $region74: #{efficientnet_forward.2} parent=61 // pred_fallthru
          _
      $region62: #{efficientnet_forward.2} parent=5 // pred_fallthru
        _
      %p529 = scmp.le.s32.totalorder 2, %s8
      // Predicated region
      $region75: #{efficientnet_forward.2} parent=5 // pred_check
        %p530 = pneg %p529
      $region76: #{efficientnet_forward.2} parent=5 // pred_check_branch
        %532 = sbr.rel (%p530) target = $region78
      $region77: #{efficientnet_forward.2} parent=5 // pred_region
        %s533 = ssub.s32 %s8, 2
        // Predicated region
        $region79: #{efficientnet_forward.2} parent=77 // pred_check
          %p534 = pneg %p115
        $region80: #{efficientnet_forward.2} parent=77 // pred_check_branch
          %536 = sbr.rel (%p534) target = $region82
        $region81: #{efficientnet_forward.2} parent=77 // pred_region
          %p537 = scmp.lt.s32.totalorder %s21, 1
          %s538 = scalar_select %p537, %s21, 1
          %p539 = scmp.lt.s32.totalorder %s22, 0
          %s540 = scalar_select %p539, %s22, 0
          %s541 = sadd.s32 %s540, %s538
          %s542 = smul.addr %s541, 2
          %s543 = scalar_lea.vmem %s2, %s542
        $region82: #{efficientnet_forward.2} parent=77 // pred_fallthru
          _
      $region78: #{efficientnet_forward.2} parent=5 // pred_fallthru
        _
    $region6: #{efficientnet_forward.2} parent=1 // loop_footer
      %s12 = sadd.s32 1, %s8
    $region7: #{efficientnet_forward.2} parent=1 // loop_footer_branch
      %7 = sbr.rel target = $region3
    $region8: #{efficientnet_forward.2} parent=1 // loop_exit
      _

// kernel: efficientnet_forward.3
$region0: #{efficientnet_forward.3}
  #allocation0 [shape = 'u32[]', space=smem, size = 0x4, offset = 0x4, fixed_abs, tag = 'smem constant byte address 0x4 - core index']
  #allocation1 [shape = 'u32[144,128]{1,0:T(1,128)}', space=vmem, size = 0x12000, scoped, tag = 'internal scratch']
  %s0 = inlined_call_operand.vmem [shape: f32[2,2,32], index: 0, kind: input, shape index: {}]
  %s1 = inlined_call_operand.vmem [shape: f32[32,1280], index: 1, kind: input, shape index: {}]
  %s2 = inlined_call_operand.vmem [shape: f32[1,1280], index: 2, kind: input, shape index: {}]
  %s3 = inlined_call_operand.vmem [shape: f32[1280,12], index: 3, kind: input, shape index: {}]
  %s4 = inlined_call_operand.vmem [shape: f32[1,12], index: 4, kind: input, shape index: {}]
  %s5 = inlined_call_operand.vmem [shape: f32[2,12], index: 5, kind: output, shape index: {}]
  %s6 = sld [smem:[#allocation0]]
  $region30: #{efficientnet_forward.3} parent=0
    _
  %s8 = ssub.s32 1, %s6
  %s9 = scalar_select 0, %s8, %s6
  // Predicated region
  $region2: #{efficientnet_forward.3} parent=0 // pred_check
    _
  $region3: #{efficientnet_forward.3} parent=0 // pred_check_branch
    %11 = sbr.rel (0) target = $region5
  $region4: #{efficientnet_forward.3} parent=0 // pred_region
    _
  $region5: #{efficientnet_forward.3} parent=0 // pred_fallthru
    _
  // Predicated region
  $region6: #{efficientnet_forward.3} parent=0 // pred_check
    _
  $region7: #{efficientnet_forward.3} parent=0 // pred_check_branch
    %13 = sbr.rel (0) target = $region9
  $region8: #{efficientnet_forward.3} parent=0 // pred_region
    _
  $region9: #{efficientnet_forward.3} parent=0 // pred_fallthru
    _
  // Predicated region
  $region10: #{efficientnet_forward.3} parent=0 // pred_check
    _
  $region11: #{efficientnet_forward.3} parent=0 // pred_check_branch
    %15 = sbr.rel (0) target = $region13
  $region12: #{efficientnet_forward.3} parent=0 // pred_region
    _
  $region13: #{efficientnet_forward.3} parent=0 // pred_fallthru
    _
  // Predicated region
  $region14: #{efficientnet_forward.3} parent=0 // pred_check
    _
  $region15: #{efficientnet_forward.3} parent=0 // pred_check_branch
    %17 = sbr.rel (0) target = $region17
  $region16: #{efficientnet_forward.3} parent=0 // pred_region
    _
  $region17: #{efficientnet_forward.3} parent=0 // pred_fallthru
    _
  // Predicated region
  $region18: #{efficientnet_forward.3} parent=0 // pred_check
    _
  $region19: #{efficientnet_forward.3} parent=0 // pred_check_branch
    %19 = sbr.rel (0) target = $region21
  $region20: #{efficientnet_forward.3} parent=0 // pred_region
    _
  $region21: #{efficientnet_forward.3} parent=0 // pred_fallthru
    _
  %v20 = vld [vmem:[%s0] sm:$0x3]
  %v21 = vld [vmem:[%s0 + $0x2] sm:$0x3]
  %vm22 = vcmask 254976
  %v23 = vsel %vm22, %v20, 0.0
  %v24 = vsel %vm22, %v21, 0.0
  %v25 = vadd.f32 %v23, %v24
  %v26 = vmul.f32 %v25, 0.0013717421
  %v27 = vld [vmem:[%s1] sm:$0xff]
  %v28 = vld [vmem:[%s1 + $0x8] sm:$0xff]
  %v29 = vld [vmem:[%s1 + $0x10] sm:$0xff]
  %v30 = vld [vmem:[%s1 + $0x18] sm:$0xff]
  %v31 = vld [vmem:[%s1 + $0x20] sm:$0xff]
  %v32 = vld [vmem:[%s1 + $0x28] sm:$0xff]
  %v33 = vld [vmem:[%s1 + $0x30] sm:$0xff]
  %v34 = vld [vmem:[%s1 + $0x38] sm:$0xff]
  %v35 = vld [vmem:[%s1 + $0x40] sm:$0xff]
  %v36 = vld [vmem:[%s1 + $0x48] sm:$0xff]
  %v37 = vld [vmem:[%s1 + $0x50] sm:$0xff]
  %v38 = vld [vmem:[%s1 + $0x58] sm:$0xff]
  %v39 = vld [vmem:[%s1 + $0x60] sm:$0xff]
  %v40 = vld [vmem:[%s1 + $0x68] sm:$0xff]
  %v41 = vld [vmem:[%s1 + $0x70] sm:$0xff]
  %v42 = vld [vmem:[%s1 + $0x78] sm:$0xff]
  %v43 = vld [vmem:[%s1 + $0x80] sm:$0xff]
  %v44 = vld [vmem:[%s1 + $0x88] sm:$0xff]
  %v45 = vld [vmem:[%s1 + $0x90] sm:$0xff]
  %v46 = vld [vmem:[%s1 + $0x98] sm:$0xff]
  %v47 = vld [vmem:[%s1 + $0xa0] sm:$0xff]
  %v48 = vld [vmem:[%s1 + $0xa8] sm:$0xff]
  %v49 = vld [vmem:[%s1 + $0xb0] sm:$0xff]
  %v50 = vld [vmem:[%s1 + $0xb8] sm:$0xff]
  %v51 = vld [vmem:[%s1 + $0xc0] sm:$0xff]
  %v52 = vld [vmem:[%s1 + $0xc8] sm:$0xff]
  %v53 = vld [vmem:[%s1 + $0xd0] sm:$0xff]
  %v54 = vld [vmem:[%s1 + $0xd8] sm:$0xff]
  %v55 = vld [vmem:[%s1 + $0xe0] sm:$0xff]
  %v56 = vld [vmem:[%s1 + $0xe8] sm:$0xff]
  %v57 = vld [vmem:[%s1 + $0xf0] sm:$0xff]
  %v58 = vld [vmem:[%s1 + $0xf8] sm:$0xff]
  %v59 = vld [vmem:[%s1 + $0x100] sm:$0xff]
  %v60 = vld [vmem:[%s1 + $0x108] sm:$0xff]
  %v61 = vld [vmem:[%s1 + $0x110] sm:$0xff]
  %v62 = vld [vmem:[%s1 + $0x118] sm:$0xff]
  %v63 = vld [vmem:[%s1 + $0x120] sm:$0xff]
  %v64 = vld [vmem:[%s1 + $0x128] sm:$0xff]
  %v65 = vld [vmem:[%s1 + $0x130] sm:$0xff]
  %v66 = vld [vmem:[%s1 + $0x138] sm:$0xff]
  %v67 = vld [vmem:[%s2] sm:$0xff]
  %v68 = vld [vmem:[%s2 + $0x8] sm:$0x3]
  %v71 = vlaneseq
  %v72 = vshrl.u32 %v71, 7
  %v73 = vsub.s32 0, %v72
  %v74 = vrot.slane %v67, %v73
  %v75 = vlaneseq
  %v76 = vshrl.u32 %v75, 7
  %v77 = vsub.s32 1, %v76
  %v78 = vrot.slane %v67, %v77
  %v79 = vlaneseq
  %v80 = vshrl.u32 %v79, 7
  %v81 = vsub.s32 2, %v80
  %v82 = vrot.slane %v67, %v81
  %v83 = vlaneseq
  %v84 = vshrl.u32 %v83, 7
  %v85 = vsub.s32 3, %v84
  %v86 = vrot.slane %v67, %v85
  %v87 = vlaneseq
  %v88 = vshrl.u32 %v87, 7
  %v89 = vsub.s32 4, %v88
  %v90 = vrot.slane %v67, %v89
  %v91 = vlaneseq
  %v92 = vshrl.u32 %v91, 7
  %v93 = vsub.s32 5, %v92
  %v94 = vrot.slane %v67, %v93
  %v95 = vlaneseq
  %v96 = vshrl.u32 %v95, 7
  %v97 = vsub.s32 6, %v96
  %v98 = vrot.slane %v67, %v97
  %v99 = vlaneseq
  %v100 = vshrl.u32 %v99, 7
  %v101 = vsub.s32 7, %v100
  %v102 = vrot.slane %v67, %v101
  %v103 = vlaneseq
  %v104 = vshrl.u32 %v103, 7
  %v105 = vsub.s32 0, %v104
  %v106 = vrot.slane %v68, %v105
  %v107 = vlaneseq
  %v108 = vshrl.u32 %v107, 7
  %v109 = vsub.s32 1, %v108
  %v110 = vrot.slane %v68, %v109
  %vm121 = vcmask 261120
  %v123 = vsel %vm121, %v26, 0
  %125 = vmatprep.subr.mxu0 0.0
  %126 = vmatpush1.msra.mxu0 0.0
  %127 = vmatprep.subr.mxu0 0.0
  %128 = vmatpush1.msra.mxu0 0.0
  %129 = vmatprep.subr.mxu0 0.0
  %130 = vmatpush1.msra.mxu0 0.0
  %131 = vmatprep.subr.mxu0 0.0
  %132 = vmatpush1.msra.mxu0 0.0
  %133 = vmatprep.subr.mxu0 0.0
  %134 = vmatpush1.msra.mxu0 0.0
  %135 = vmatprep.subr.mxu0 0.0
  %136 = vmatpush1.msra.mxu0 0.0
  %137 = vmatprep.subr.mxu0 0.0
  %138 = vmatpush1.msra.mxu0 0.0
  %139 = vmatprep.subr.mxu0 0.0
  %140 = vmatpush1.msra.mxu0 0.0
  %141 = vmatprep.subr.mxu0 0.0
  %142 = vmatpush1.msra.mxu0 0.0
  %143 = vmatprep.subr.mxu0 0.0
  %144 = vmatpush1.msra.mxu0 0.0
  %145 = vmatprep.subr.mxu0 0.0
  %146 = vmatpush1.msra.mxu0 0.0
  %147 = vmatprep.subr.mxu0 0.0
  %148 = vmatpush1.msra.mxu0 0.0
  %149 = vmatprep.subr.mxu0 %v58
  %150 = vmatpush1.msra.mxu0 %v57
  %151 = vmatprep.subr.mxu0 %v48
  %152 = vmatpush1.msra.mxu0 %v47
  %153 = vmatprep.subr.mxu0 %v38
  %154 = vmatpush1.msra.mxu0 %v37
  %155 = vmatprep.subr.mxu0 %v28
  %156 = vmatpush1.msra.mxu0 %v27
  %157 = vmatprep.subr.mxu0 0.0
  %158 = vmatpush2.msra.mxu0 0.0
  %159 = vmatprep.subr.mxu0 0.0
  %160 = vmatpush2.msra.mxu0 0.0
  %161 = vmatprep.subr.mxu0 0.0
  %162 = vmatpush2.msra.mxu0 0.0
  %163 = vmatprep.subr.mxu0 0.0
  %164 = vmatpush2.msra.mxu0 0.0
  %165 = vmatprep.subr.mxu0 0.0
  %166 = vmatpush2.msra.mxu0 0.0
  %167 = vmatprep.subr.mxu0 0.0
  %168 = vmatpush2.msra.mxu0 0.0
  %169 = vmatprep.subr.mxu0 0.0
  %170 = vmatpush2.msra.mxu0 0.0
  %171 = vmatprep.subr.mxu0 0.0
  %172 = vmatpush2.msra.mxu0 0.0
  %173 = vmatprep.subr.mxu0 0.0
  %174 = vmatpush2.msra.mxu0 0.0
  %175 = vmatprep.subr.mxu0 0.0
  %176 = vmatpush2.msra.mxu0 0.0
  %177 = vmatprep.subr.mxu0 0.0
  %178 = vmatpush2.msra.mxu0 0.0
  %179 = vmatprep.subr.mxu0 0.0
  %180 = vmatpush2.msra.mxu0 0.0
  %181 = vmatprep.subr.mxu0 0.0
  %182 = vmatpush2.msra.mxu0 0.0
  %183 = vmatprep.subr.mxu0 0.0
  %184 = vmatpush2.msra.mxu0 0.0
  %185 = vmatprep.subr.mxu0 0.0
  %186 = vmatpush2.msra.mxu0 0.0
  %187 = vmatprep.subr.mxu0 0.0
  %188 = vmatpush2.msra.mxu0 0.0
  %189 = vmatprep.mubr.f32.mxu0 0.0
  %190 = vmatmul.mubr.f32.gmra.mxu0 %v123
  %v191 = vpop.f32.mrf.mxu0
  %v192 = vadd.f32 %v74, %v191
  %v193 = vpop.f32.mrf.mxu0
  %v194 = vadd.f32 %v78, %v193
  %195 = vdwg.mxu0
  %196 = vmatprep.subr.mxu0 0.0
  %197 = vmatpush1.msra.mxu0 0.0
  %198 = vmatprep.subr.mxu0 0.0
  %199 = vmatpush1.msra.mxu0 0.0
  %200 = vmatprep.subr.mxu0 0.0
  %201 = vmatpush1.msra.mxu0 0.0
  %202 = vmatprep.subr.mxu0 0.0
  %203 = vmatpush1.msra.mxu0 0.0
  %204 = vmatprep.subr.mxu0 0.0
  %205 = vmatpush1.msra.mxu0 0.0
  %206 = vmatprep.subr.mxu0 0.0
  %207 = vmatpush1.msra.mxu0 0.0
  %208 = vmatprep.subr.mxu0 0.0
  %209 = vmatpush1.msra.mxu0 0.0
  %210 = vmatprep.subr.mxu0 0.0
  %211 = vmatpush1.msra.mxu0 0.0
  %212 = vmatprep.subr.mxu0 0.0
  %213 = vmatpush1.msra.mxu0 0.0
  %214 = vmatprep.subr.mxu0 0.0
  %215 = vmatpush1.msra.mxu0 0.0
  %216 = vmatprep.subr.mxu0 0.0
  %217 = vmatpush1.msra.mxu0 0.0
  %218 = vmatprep.subr.mxu0 0.0
  %219 = vmatpush1.msra.mxu0 0.0
  %220 = vmatprep.subr.mxu0 %v60
  %221 = vmatpush1.msra.mxu0 %v59
  %222 = vmatprep.subr.mxu0 %v50
  %223 = vmatpush1.msra.mxu0 %v49
  %224 = vmatprep.subr.mxu0 %v40
  %225 = vmatpush1.msra.mxu0 %v39
  %226 = vmatprep.subr.mxu0 %v30
  %227 = vmatpush1.msra.mxu0 %v29
  %228 = vmatprep.subr.mxu0 0.0
  %229 = vmatpush2.msra.mxu0 0.0
  %230 = vmatprep.subr.mxu0 0.0
  %231 = vmatpush2.msra.mxu0 0.0
  %232 = vmatprep.subr.mxu0 0.0
  %233 = vmatpush2.msra.mxu0 0.0
  %234 = vmatprep.subr.mxu0 0.0
  %235 = vmatpush2.msra.mxu0 0.0
  %236 = vmatprep.subr.mxu0 0.0
  %237 = vmatpush2.msra.mxu0 0.0
  %238 = vmatprep.subr.mxu0 0.0
  %239 = vmatpush2.msra.mxu0 0.0
  %240 = vmatprep.subr.mxu0 0.0
  %241 = vmatpush2.msra.mxu0 0.0
  %242 = vmatprep.subr.mxu0 0.0
  %243 = vmatpush2.msra.mxu0 0.0
  %244 = vmatprep.subr.mxu0 0.0
  %245 = vmatpush2.msra.mxu0 0.0
  %246 = vmatprep.subr.mxu0 0.0
  %247 = vmatpush2.msra.mxu0 0.0
  %248 = vmatprep.subr.mxu0 0.0
  %249 = vmatpush2.msra.mxu0 0.0
  %250 = vmatprep.subr.mxu0 0.0
  %251 = vmatpush2.msra.mxu0 0.0
  %252 = vmatprep.subr.mxu0 0.0
  %253 = vmatpush2.msra.mxu0 0.0
  %254 = vmatprep.subr.mxu0 0.0
  %255 = vmatpush2.msra.mxu0 0.0
  %256 = vmatprep.subr.mxu0 0.0
  %257 = vmatpush2.msra.mxu0 0.0
  %258 = vmatprep.subr.mxu0 0.0
  %259 = vmatpush2.msra.mxu0 0.0
  %260 = vmatprep.mubr.f32.mxu0 0.0
  %261 = vmatmul.mubr.f32.gmra.mxu0 %v123
  %v262 = vpop.f32.mrf.mxu0
  %v263 = vadd.f32 %v82, %v262
  %v264 = vpop.f32.mrf.mxu0
  %v265 = vadd.f32 %v86, %v264
  %266 = vdwg.mxu0
  %267 = vmatprep.subr.mxu0 0.0
  %268 = vmatpush1.msra.mxu0 0.0
  %269 = vmatprep.subr.mxu0 0.0
  %270 = vmatpush1.msra.mxu0 0.0
  %271 = vmatprep.subr.mxu0 0.0
  %272 = vmatpush1.msra.mxu0 0.0
  %273 = vmatprep.subr.mxu0 0.0
  %274 = vmatpush1.msra.mxu0 0.0
  %275 = vmatprep.subr.mxu0 0.0
  %276 = vmatpush1.msra.mxu0 0.0
  %277 = vmatprep.subr.mxu0 0.0
  %278 = vmatpush1.msra.mxu0 0.0
  %279 = vmatprep.subr.mxu0 0.0
  %280 = vmatpush1.msra.mxu0 0.0
  %281 = vmatprep.subr.mxu0 0.0
  %282 = vmatpush1.msra.mxu0 0.0
  %283 = vmatprep.subr.mxu0 0.0
  %284 = vmatpush1.msra.mxu0 0.0
  %285 = vmatprep.subr.mxu0 0.0
  %286 = vmatpush1.msra.mxu0 0.0
  %287 = vmatprep.subr.mxu0 0.0
  %288 = vmatpush1.msra.mxu0 0.0
  %289 = vmatprep.subr.mxu0 0.0
  %290 = vmatpush1.msra.mxu0 0.0
  %291 = vmatprep.subr.mxu0 %v62
  %292 = vmatpush1.msra.mxu0 %v61
  %293 = vmatprep.subr.mxu0 %v52
  %294 = vmatpush1.msra.mxu0 %v51
  %295 = vmatprep.subr.mxu0 %v42
  %296 = vmatpush1.msra.mxu0 %v41
  %297 = vmatprep.subr.mxu0 %v32
  %298 = vmatpush1.msra.mxu0 %v31
  %299 = vmatprep.subr.mxu0 0.0
  %300 = vmatpush2.msra.mxu0 0.0
  %301 = vmatprep.subr.mxu0 0.0
  %302 = vmatpush2.msra.mxu0 0.0
  %303 = vmatprep.subr.mxu0 0.0
  %304 = vmatpush2.msra.mxu0 0.0
  %305 = vmatprep.subr.mxu0 0.0
  %306 = vmatpush2.msra.mxu0 0.0
  %307 = vmatprep.subr.mxu0 0.0
  %308 = vmatpush2.msra.mxu0 0.0
  %309 = vmatprep.subr.mxu0 0.0
  %310 = vmatpush2.msra.mxu0 0.0
  %311 = vmatprep.subr.mxu0 0.0
  %312 = vmatpush2.msra.mxu0 0.0
  %313 = vmatprep.subr.mxu0 0.0
  %314 = vmatpush2.msra.mxu0 0.0
  %315 = vmatprep.subr.mxu0 0.0
  %316 = vmatpush2.msra.mxu0 0.0
  %317 = vmatprep.subr.mxu0 0.0
  %318 = vmatpush2.msra.mxu0 0.0
  %319 = vmatprep.subr.mxu0 0.0
  %320 = vmatpush2.msra.mxu0 0.0
  %321 = vmatprep.subr.mxu0 0.0
  %322 = vmatpush2.msra.mxu0 0.0
  %323 = vmatprep.subr.mxu0 0.0
  %324 = vmatpush2.msra.mxu0 0.0
  %325 = vmatprep.subr.mxu0 0.0
  %326 = vmatpush2.msra.mxu0 0.0
  %327 = vmatprep.subr.mxu0 0.0
  %328 = vmatpush2.msra.mxu0 0.0
  %329 = vmatprep.subr.mxu0 0.0
  %330 = vmatpush2.msra.mxu0 0.0
  %331 = vmatprep.mubr.f32.mxu0 0.0
  %332 = vmatmul.mubr.f32.gmra.mxu0 %v123
  %v333 = vpop.f32.mrf.mxu0
  %v334 = vadd.f32 %v90, %v333
  %v335 = vpop.f32.mrf.mxu0
  %v336 = vadd.f32 %v94, %v335
  %337 = vdwg.mxu0
  %338 = vmatprep.subr.mxu0 0.0
  %339 = vmatpush1.msra.mxu0 0.0
  %340 = vmatprep.subr.mxu0 0.0
  %341 = vmatpush1.msra.mxu0 0.0
  %342 = vmatprep.subr.mxu0 0.0
  %343 = vmatpush1.msra.mxu0 0.0
  %344 = vmatprep.subr.mxu0 0.0
  %345 = vmatpush1.msra.mxu0 0.0
  %346 = vmatprep.subr.mxu0 0.0
  %347 = vmatpush1.msra.mxu0 0.0
  %348 = vmatprep.subr.mxu0 0.0
  %349 = vmatpush1.msra.mxu0 0.0
  %350 = vmatprep.subr.mxu0 0.0
  %351 = vmatpush1.msra.mxu0 0.0
  %352 = vmatprep.subr.mxu0 0.0
  %353 = vmatpush1.msra.mxu0 0.0
  %354 = vmatprep.subr.mxu0 0.0
  %355 = vmatpush1.msra.mxu0 0.0
  %356 = vmatprep.subr.mxu0 0.0
  %357 = vmatpush1.msra.mxu0 0.0
  %358 = vmatprep.subr.mxu0 0.0
  %359 = vmatpush1.msra.mxu0 0.0
  %360 = vmatprep.subr.mxu0 0.0
  %361 = vmatpush1.msra.mxu0 0.0
  %362 = vmatprep.subr.mxu0 %v64
  %363 = vmatpush1.msra.mxu0 %v63
  %364 = vmatprep.subr.mxu0 %v54
  %365 = vmatpush1.msra.mxu0 %v53
  %366 = vmatprep.subr.mxu0 %v44
  %367 = vmatpush1.msra.mxu0 %v43
  %368 = vmatprep.subr.mxu0 %v34
  %369 = vmatpush1.msra.mxu0 %v33
  %370 = vmatprep.subr.mxu0 0.0
  %371 = vmatpush2.msra.mxu0 0.0
  %372 = vmatprep.subr.mxu0 0.0
  %373 = vmatpush2.msra.mxu0 0.0
  %374 = vmatprep.subr.mxu0 0.0
  %375 = vmatpush2.msra.mxu0 0.0
  %376 = vmatprep.subr.mxu0 0.0
  %377 = vmatpush2.msra.mxu0 0.0
  %378 = vmatprep.subr.mxu0 0.0
  %379 = vmatpush2.msra.mxu0 0.0
  %380 = vmatprep.subr.mxu0 0.0
  %381 = vmatpush2.msra.mxu0 0.0
  %382 = vmatprep.subr.mxu0 0.0
  %383 = vmatpush2.msra.mxu0 0.0
  %384 = vmatprep.subr.mxu0 0.0
  %385 = vmatpush2.msra.mxu0 0.0
  %386 = vmatprep.subr.mxu0 0.0
  %387 = vmatpush2.msra.mxu0 0.0
  %388 = vmatprep.subr.mxu0 0.0
  %389 = vmatpush2.msra.mxu0 0.0
  %390 = vmatprep.subr.mxu0 0.0
  %391 = vmatpush2.msra.mxu0 0.0
  %392 = vmatprep.subr.mxu0 0.0
  %393 = vmatpush2.msra.mxu0 0.0
  %394 = vmatprep.subr.mxu0 0.0
  %395 = vmatpush2.msra.mxu0 0.0
  %396 = vmatprep.subr.mxu0 0.0
  %397 = vmatpush2.msra.mxu0 0.0
  %398 = vmatprep.subr.mxu0 0.0
  %399 = vmatpush2.msra.mxu0 0.0
  %400 = vmatprep.subr.mxu0 0.0
  %401 = vmatpush2.msra.mxu0 0.0
  %402 = vmatprep.mubr.f32.mxu0 0.0
  %403 = vmatmul.mubr.f32.gmra.mxu0 %v123
  %v404 = vpop.f32.mrf.mxu0
  %v405 = vadd.f32 %v98, %v404
  %v406 = vpop.f32.mrf.mxu0
  %v407 = vadd.f32 %v102, %v406
  %408 = vdwg.mxu0
  %409 = vmatprep.subr.mxu0 0.0
  %410 = vmatpush1.msra.mxu0 0.0
  %411 = vmatprep.subr.mxu0 0.0
  %412 = vmatpush1.msra.mxu0 0.0
  %413 = vmatprep.subr.mxu0 0.0
  %414 = vmatpush1.msra.mxu0 0.0
  %415 = vmatprep.subr.mxu0 0.0
  %416 = vmatpush1.msra.mxu0 0.0
  %417 = vmatprep.subr.mxu0 0.0
  %418 = vmatpush1.msra.mxu0 0.0
  %419 = vmatprep.subr.mxu0 0.0
  %420 = vmatpush1.msra.mxu0 0.0
  %421 = vmatprep.subr.mxu0 0.0
  %422 = vmatpush1.msra.mxu0 0.0
  %423 = vmatprep.subr.mxu0 0.0
  %424 = vmatpush1.msra.mxu0 0.0
  %425 = vmatprep.subr.mxu0 0.0
  %426 = vmatpush1.msra.mxu0 0.0
  %427 = vmatprep.subr.mxu0 0.0
  %428 = vmatpush1.msra.mxu0 0.0
  %429 = vmatprep.subr.mxu0 0.0
  %430 = vmatpush1.msra.mxu0 0.0
  %431 = vmatprep.subr.mxu0 0.0
  %432 = vmatpush1.msra.mxu0 0.0
  %433 = vmatprep.subr.mxu0 %v66
  %434 = vmatpush1.msra.mxu0 %v65
  %435 = vmatprep.subr.mxu0 %v56
  %436 = vmatpush1.msra.mxu0 %v55
  %437 = vmatprep.subr.mxu0 %v46
  %438 = vmatpush1.msra.mxu0 %v45
  %439 = vmatprep.subr.mxu0 %v36
  %440 = vmatpush1.msra.mxu0 %v35
  %441 = vmatprep.subr.mxu0 0.0
  %442 = vmatpush2.msra.mxu0 0.0
  %443 = vmatprep.subr.mxu0 0.0
  %444 = vmatpush2.msra.mxu0 0.0
  %445 = vmatprep.subr.mxu0 0.0
  %446 = vmatpush2.msra.mxu0 0.0
  %447 = vmatprep.subr.mxu0 0.0
  %448 = vmatpush2.msra.mxu0 0.0
  %449 = vmatprep.subr.mxu0 0.0
  %450 = vmatpush2.msra.mxu0 0.0
  %451 = vmatprep.subr.mxu0 0.0
  %452 = vmatpush2.msra.mxu0 0.0
  %453 = vmatprep.subr.mxu0 0.0
  %454 = vmatpush2.msra.mxu0 0.0
  %455 = vmatprep.subr.mxu0 0.0
  %456 = vmatpush2.msra.mxu0 0.0
  %457 = vmatprep.subr.mxu0 0.0
  %458 = vmatpush2.msra.mxu0 0.0
  %459 = vmatprep.subr.mxu0 0.0
  %460 = vmatpush2.msra.mxu0 0.0
  %461 = vmatprep.subr.mxu0 0.0
  %462 = vmatpush2.msra.mxu0 0.0
  %463 = vmatprep.subr.mxu0 0.0
  %464 = vmatpush2.msra.mxu0 0.0
  %465 = vmatprep.subr.mxu0 0.0
  %466 = vmatpush2.msra.mxu0 0.0
  %467 = vmatprep.subr.mxu0 0.0
  %468 = vmatpush2.msra.mxu0 0.0
  %469 = vmatprep.subr.mxu0 0.0
  %470 = vmatpush2.msra.mxu0 0.0
  %471 = vmatprep.subr.mxu0 0.0
  %472 = vmatpush2.msra.mxu0 0.0
  %473 = vmatprep.mubr.f32.mxu0 0.0
  %474 = vmatmul.mubr.f32.gmra.mxu0 %v123
  %v475 = vpop.f32.mrf.mxu0
  %v476 = vadd.f32 %v106, %v475
  %v477 = vpop.f32.mrf.mxu0
  %v478 = vadd.f32 %v110, %v477
  %479 = vdwg.mxu0
  %v480 = vmul.f32 %v192, 0.5
  %v481 = vmul.f32 %v194, 0.5
  %v482 = vmul.f32 %v263, 0.5
  %v483 = vmul.f32 %v265, 0.5
  %v484 = vmul.f32 %v334, 0.5
  %v485 = vmul.f32 %v336, 0.5
  %v486 = vmul.f32 %v405, 0.5
  %v487 = vmul.f32 %v407, 0.5
  %v488 = vmul.f32 %v476, 0.5
  %v489 = vmul.f32 %v478, 0.5
  %v490 = vtanh.pop %v480
  %v491 = vtanh.pop %v481
  %v492 = vtanh.pop %v482
  %v493 = vtanh.pop %v483
  %v494 = vtanh.pop %v484
  %v495 = vtanh.pop %v485
  %v496 = vtanh.pop %v486
  %v497 = vtanh.pop %v487
  %v498 = vtanh.pop %v488
  %v499 = vtanh.pop %v489
  %v500 = vadd.f32 %v490, 1.0
  %v501 = vadd.f32 %v491, 1.0
  %v502 = vadd.f32 %v492, 1.0
  %v503 = vadd.f32 %v493, 1.0
  %v504 = vadd.f32 %v494, 1.0
  %v505 = vadd.f32 %v495, 1.0
  %v506 = vadd.f32 %v496, 1.0
  %v507 = vadd.f32 %v497, 1.0
  %v508 = vadd.f32 %v498, 1.0
  %v509 = vadd.f32 %v499, 1.0
  %v510 = vmul.f32 %v500, 0.5
  %v511 = vmul.f32 %v501, 0.5
  %v512 = vmul.f32 %v502, 0.5
  %v513 = vmul.f32 %v503, 0.5
  %v514 = vmul.f32 %v504, 0.5
  %v515 = vmul.f32 %v505, 0.5
  %v516 = vmul.f32 %v506, 0.5
  %v517 = vmul.f32 %v507, 0.5
  %v518 = vmul.f32 %v508, 0.5
  %v519 = vmul.f32 %v509, 0.5
  %v520 = vmul.f32 %v192, %v510
  %v521 = vmul.f32 %v194, %v511
  %v522 = vmul.f32 %v263, %v512
  %v523 = vmul.f32 %v265, %v513
  %v524 = vmul.f32 %v334, %v514
  %v525 = vmul.f32 %v336, %v515
  %v526 = vmul.f32 %v405, %v516
  %v527 = vmul.f32 %v407, %v517
  %v528 = vmul.f32 %v476, %v518
  %v529 = vmul.f32 %v478, %v519
  %v530 = vld [vmem:[%s3] sm:$0xff]
  %v531 = vld [vmem:[%s3 + $0x8] sm:$0xff]
  %v532 = vld [vmem:[%s3 + $0x10] sm:$0xff]
  %v533 = vld [vmem:[%s3 + $0x18] sm:$0xff]
  %v534 = vld [vmem:[%s3 + $0x20] sm:$0xff]
  %v535 = vld [vmem:[%s3 + $0x28] sm:$0xff]
  %v536 = vld [vmem:[%s3 + $0x30] sm:$0xff]
  %v537 = vld [vmem:[%s3 + $0x38] sm:$0xff]
  %v538 = vld [vmem:[%s3 + $0x40] sm:$0xff]
  %v539 = vld [vmem:[%s3 + $0x48] sm:$0xff]
  %v540 = vld [vmem:[%s3 + $0x50] sm:$0xff]
  %v541 = vld [vmem:[%s3 + $0x58] sm:$0xff]
  %v542 = vld [vmem:[%s3 + $0x60] sm:$0xff]
  %v543 = vld [vmem:[%s3 + $0x68] sm:$0xff]
  %v544 = vld [vmem:[%s3 + $0x70] sm:$0xff]
  %v545 = vld [vmem:[%s3 + $0x78] sm:$0xff]
  %v546 = vld [vmem:[%s3 + $0x80] sm:$0xff]
  %v547 = vld [vmem:[%s3 + $0x88] sm:$0xff]
  %v548 = vld [vmem:[%s3 + $0x90] sm:$0xff]
  %v549 = vld [vmem:[%s3 + $0x98] sm:$0xff]
  %v550 = vld [vmem:[%s3 + $0xa0] sm:$0xff]
  %v551 = vld [vmem:[%s3 + $0xa8] sm:$0xff]
  %v552 = vld [vmem:[%s3 + $0xb0] sm:$0xff]
  %v553 = vld [vmem:[%s3 + $0xb8] sm:$0xff]
  %v554 = vld [vmem:[%s3 + $0xc0] sm:$0xff]
  %v555 = vld [vmem:[%s3 + $0xc8] sm:$0xff]
  %v556 = vld [vmem:[%s3 + $0xd0] sm:$0xff]
  %v557 = vld [vmem:[%s3 + $0xd8] sm:$0xff]
  %v558 = vld [vmem:[%s3 + $0xe0] sm:$0xff]
  %v559 = vld [vmem:[%s3 + $0xe8] sm:$0xff]
  %v560 = vld [vmem:[%s3 + $0xf0] sm:$0xff]
  %v561 = vld [vmem:[%s3 + $0xf8] sm:$0xff]
  %v562 = vld [vmem:[%s3 + $0x100] sm:$0xff]
  %v563 = vld [vmem:[%s3 + $0x108] sm:$0xff]
  %v564 = vld [vmem:[%s3 + $0x110] sm:$0xff]
  %v565 = vld [vmem:[%s3 + $0x118] sm:$0xff]
  %v566 = vld [vmem:[%s3 + $0x120] sm:$0xff]
  %v567 = vld [vmem:[%s3 + $0x128] sm:$0xff]
  %v568 = vld [vmem:[%s3 + $0x130] sm:$0xff]
  %v569 = vld [vmem:[%s3 + $0x138] sm:$0xff]
  %v570 = vld [vmem:[%s3 + $0x140] sm:$0xff]
  %v571 = vld [vmem:[%s3 + $0x148] sm:$0xff]
  %v572 = vld [vmem:[%s3 + $0x150] sm:$0xff]
  %v573 = vld [vmem:[%s3 + $0x158] sm:$0xff]
  %v574 = vld [vmem:[%s3 + $0x160] sm:$0xff]
  %v575 = vld [vmem:[%s3 + $0x168] sm:$0xff]
  %v576 = vld [vmem:[%s3 + $0x170] sm:$0xff]
  %v577 = vld [vmem:[%s3 + $0x178] sm:$0xff]
  %v578 = vld [vmem:[%s3 + $0x180] sm:$0xff]
  %v579 = vld [vmem:[%s3 + $0x188] sm:$0xff]
  %v580 = vld [vmem:[%s3 + $0x190] sm:$0xff]
  %v581 = vld [vmem:[%s3 + $0x198] sm:$0xff]
  %v582 = vld [vmem:[%s3 + $0x1a0] sm:$0xff]
  %v583 = vld [vmem:[%s3 + $0x1a8] sm:$0xff]
  %v584 = vld [vmem:[%s3 + $0x1b0] sm:$0xff]
  %v585 = vld [vmem:[%s3 + $0x1b8] sm:$0xff]
  %v586 = vld [vmem:[%s3 + $0x1c0] sm:$0xff]
  %v587 = vld [vmem:[%s3 + $0x1c8] sm:$0xff]
  %v588 = vld [vmem:[%s3 + $0x1d0] sm:$0xff]
  %v589 = vld [vmem:[%s3 + $0x1d8] sm:$0xff]
  %v590 = vld [vmem:[%s3 + $0x1e0] sm:$0xff]
  %v591 = vld [vmem:[%s3 + $0x1e8] sm:$0xff]
  %v592 = vld [vmem:[%s3 + $0x1f0] sm:$0xff]
  %v593 = vld [vmem:[%s3 + $0x1f8] sm:$0xff]
  %v594 = vld [vmem:[%s3 + $0x200] sm:$0xff]
  %v595 = vld [vmem:[%s3 + $0x208] sm:$0xff]
  %v596 = vld [vmem:[%s3 + $0x210] sm:$0xff]
  %v597 = vld [vmem:[%s3 + $0x218] sm:$0xff]
  %v598 = vld [vmem:[%s3 + $0x220] sm:$0xff]
  %v599 = vld [vmem:[%s3 + $0x228] sm:$0xff]
  %v600 = vld [vmem:[%s3 + $0x230] sm:$0xff]
  %v601 = vld [vmem:[%s3 + $0x238] sm:$0xff]
  %v602 = vld [vmem:[%s3 + $0x240] sm:$0xff]
  %v603 = vld [vmem:[%s3 + $0x248] sm:$0xff]
  %v604 = vld [vmem:[%s3 + $0x250] sm:$0xff]
  %v605 = vld [vmem:[%s3 + $0x258] sm:$0xff]
  %v606 = vld [vmem:[%s3 + $0x260] sm:$0xff]
  %v607 = vld [vmem:[%s3 + $0x268] sm:$0xff]
  %v608 = vld [vmem:[%s3 + $0x270] sm:$0xff]
  %v609 = vld [vmem:[%s3 + $0x278] sm:$0xff]
  %v610 = vld [vmem:[%s3 + $0x280] sm:$0xff]
  %v611 = vld [vmem:[%s3 + $0x288] sm:$0xff]
  %v612 = vld [vmem:[%s3 + $0x290] sm:$0xff]
  %v613 = vld [vmem:[%s3 + $0x298] sm:$0xff]
  %v614 = vld [vmem:[%s3 + $0x2a0] sm:$0xff]
  %v615 = vld [vmem:[%s3 + $0x2a8] sm:$0xff]
  %v616 = vld [vmem:[%s3 + $0x2b0] sm:$0xff]
  %v617 = vld [vmem:[%s3 + $0x2b8] sm:$0xff]
  %v618 = vld [vmem:[%s3 + $0x2c0] sm:$0xff]
  %v619 = vld [vmem:[%s3 + $0x2c8] sm:$0xff]
  %v620 = vld [vmem:[%s3 + $0x2d0] sm:$0xff]
  %v621 = vld [vmem:[%s3 + $0x2d8] sm:$0xff]
  %v622 = vld [vmem:[%s3 + $0x2e0] sm:$0xff]
  %v623 = vld [vmem:[%s3 + $0x2e8] sm:$0xff]
  %v624 = vld [vmem:[%s3 + $0x2f0] sm:$0xff]
  %v625 = vld [vmem:[%s3 + $0x2f8] sm:$0xff]
  %v626 = vld [vmem:[%s3 + $0x300] sm:$0xff]
  %v627 = vld [vmem:[%s3 + $0x308] sm:$0xff]
  %v628 = vld [vmem:[%s3 + $0x310] sm:$0xff]
  %v629 = vld [vmem:[%s3 + $0x318] sm:$0xff]
  %v630 = vld [vmem:[%s3 + $0x320] sm:$0xff]
  %v631 = vld [vmem:[%s3 + $0x328] sm:$0xff]
  %v632 = vld [vmem:[%s3 + $0x330] sm:$0xff]
  %v633 = vld [vmem:[%s3 + $0x338] sm:$0xff]
  %v634 = vld [vmem:[%s3 + $0x340] sm:$0xff]
  %v635 = vld [vmem:[%s3 + $0x348] sm:$0xff]
  %v636 = vld [vmem:[%s3 + $0x350] sm:$0xff]
  %v637 = vld [vmem:[%s3 + $0x358] sm:$0xff]
  %v638 = vld [vmem:[%s3 + $0x360] sm:$0xff]
  %v639 = vld [vmem:[%s3 + $0x368] sm:$0xff]
  %v640 = vld [vmem:[%s3 + $0x370] sm:$0xff]
  %v641 = vld [vmem:[%s3 + $0x378] sm:$0xff]
  %v642 = vld [vmem:[%s3 + $0x380] sm:$0xff]
  %v643 = vld [vmem:[%s3 + $0x388] sm:$0xff]
  %v644 = vld [vmem:[%s3 + $0x390] sm:$0xff]
  %v645 = vld [vmem:[%s3 + $0x398] sm:$0xff]
  %v646 = vld [vmem:[%s3 + $0x3a0] sm:$0xff]
  %v647 = vld [vmem:[%s3 + $0x3a8] sm:$0xff]
  %v648 = vld [vmem:[%s3 + $0x3b0] sm:$0xff]
  %v649 = vld [vmem:[%s3 + $0x3b8] sm:$0xff]
  %v650 = vld [vmem:[%s3 + $0x3c0] sm:$0xff]
  %v651 = vld [vmem:[%s3 + $0x3c8] sm:$0xff]
  %v652 = vld [vmem:[%s3 + $0x3d0] sm:$0xff]
  %v653 = vld [vmem:[%s3 + $0x3d8] sm:$0xff]
  %v654 = vld [vmem:[%s3 + $0x3e0] sm:$0xff]
  %v655 = vld [vmem:[%s3 + $0x3e8] sm:$0xff]
  %v656 = vld [vmem:[%s3 + $0x3f0] sm:$0xff]
  %v657 = vld [vmem:[%s3 + $0x3f8] sm:$0xff]
  %v658 = vld [vmem:[%s3 + $0x400] sm:$0xff]
  %v659 = vld [vmem:[%s3 + $0x408] sm:$0xff]
  %v660 = vld [vmem:[%s3 + $0x410] sm:$0xff]
  %v661 = vld [vmem:[%s3 + $0x418] sm:$0xff]
  %v662 = vld [vmem:[%s3 + $0x420] sm:$0xff]
  %v663 = vld [vmem:[%s3 + $0x428] sm:$0xff]
  %v664 = vld [vmem:[%s3 + $0x430] sm:$0xff]
  %v665 = vld [vmem:[%s3 + $0x438] sm:$0xff]
  %v666 = vld [vmem:[%s3 + $0x440] sm:$0xff]
  %v667 = vld [vmem:[%s3 + $0x448] sm:$0xff]
  %v668 = vld [vmem:[%s3 + $0x450] sm:$0xff]
  %v669 = vld [vmem:[%s3 + $0x458] sm:$0xff]
  %v670 = vld [vmem:[%s3 + $0x460] sm:$0xff]
  %v671 = vld [vmem:[%s3 + $0x468] sm:$0xff]
  %v672 = vld [vmem:[%s3 + $0x470] sm:$0xff]
  %v673 = vld [vmem:[%s3 + $0x478] sm:$0xff]
  %v674 = vld [vmem:[%s3 + $0x480] sm:$0xff]
  %v675 = vld [vmem:[%s3 + $0x488] sm:$0xff]
  %v676 = vld [vmem:[%s3 + $0x490] sm:$0xff]
  %v677 = vld [vmem:[%s3 + $0x498] sm:$0xff]
  %v678 = vld [vmem:[%s3 + $0x4a0] sm:$0xff]
  %v679 = vld [vmem:[%s3 + $0x4a8] sm:$0xff]
  %v680 = vld [vmem:[%s3 + $0x4b0] sm:$0xff]
  %v681 = vld [vmem:[%s3 + $0x4b8] sm:$0xff]
  %v682 = vld [vmem:[%s3 + $0x4c0] sm:$0xff]
  %v683 = vld [vmem:[%s3 + $0x4c8] sm:$0xff]
  %v684 = vld [vmem:[%s3 + $0x4d0] sm:$0xff]
  %v685 = vld [vmem:[%s3 + $0x4d8] sm:$0xff]
  %v686 = vld [vmem:[%s3 + $0x4e0] sm:$0xff]
  %v687 = vld [vmem:[%s3 + $0x4e8] sm:$0xff]
  %v688 = vld [vmem:[%s3 + $0x4f0] sm:$0xff]
  %v689 = vld [vmem:[%s3 + $0x4f8] sm:$0xff]
  %v690 = vld [vmem:[%s4] sm:$0x1]
  %v692 = vlaneseq
  %v693 = vshrl.u32 %v692, 7
  %v694 = vsub.s32 0, %v693
  %v695 = vrot.slane %v690, %v694
  %697 = vmatprep.subr.mxu0 0.0
  %698 = vmatpush1.msra.mxu0 %v545
  %699 = vmatprep.subr.mxu0 0.0
  %700 = vmatpush1.msra.mxu0 %v544
  %701 = vmatprep.subr.mxu0 0.0
  %702 = vmatpush1.msra.mxu0 %v543
  %703 = vmatprep.subr.mxu0 0.0
  %704 = vmatpush1.msra.mxu0 %v542
  %705 = vmatprep.subr.mxu0 0.0
  %706 = vmatpush1.msra.mxu0 %v541
  %707 = vmatprep.subr.mxu0 0.0
  %708 = vmatpush1.msra.mxu0 %v540
  %709 = vmatprep.subr.mxu0 0.0
  %710 = vmatpush1.msra.mxu0 %v539
  %711 = vmatprep.subr.mxu0 0.0
  %712 = vmatpush1.msra.mxu0 %v538
  %713 = vmatprep.subr.mxu0 0.0
  %714 = vmatpush1.msra.mxu0 %v537
  %715 = vmatprep.subr.mxu0 0.0
  %716 = vmatpush1.msra.mxu0 %v536
  %717 = vmatprep.subr.mxu0 0.0
  %718 = vmatpush1.msra.mxu0 %v535
  %719 = vmatprep.subr.mxu0 0.0
  %720 = vmatpush1.msra.mxu0 %v534
  %721 = vmatprep.subr.mxu0 0.0
  %722 = vmatpush1.msra.mxu0 %v533
  %723 = vmatprep.subr.mxu0 0.0
  %724 = vmatpush1.msra.mxu0 %v532
  %725 = vmatprep.subr.mxu0 0.0
  %726 = vmatpush1.msra.mxu0 %v531
  %727 = vmatprep.subr.mxu0 0.0
  %728 = vmatpush1.msra.mxu0 %v530
  %729 = vmatprep.subr.mxu0 0.0
  %730 = vmatpush2.msra.mxu0 %v561
  %731 = vmatprep.subr.mxu0 0.0
  %732 = vmatpush2.msra.mxu0 %v560
  %733 = vmatprep.subr.mxu0 0.0
  %734 = vmatpush2.msra.mxu0 %v559
  %735 = vmatprep.subr.mxu0 0.0
  %736 = vmatpush2.msra.mxu0 %v558
  %737 = vmatprep.subr.mxu0 0.0
  %738 = vmatpush2.msra.mxu0 %v557
  %739 = vmatprep.subr.mxu0 0.0
  %740 = vmatpush2.msra.mxu0 %v556
  %741 = vmatprep.subr.mxu0 0.0
  %742 = vmatpush2.msra.mxu0 %v555
  %743 = vmatprep.subr.mxu0 0.0
  %744 = vmatpush2.msra.mxu0 %v554
  %745 = vmatprep.subr.mxu0 0.0
  %746 = vmatpush2.msra.mxu0 %v553
  %747 = vmatprep.subr.mxu0 0.0
  %748 = vmatpush2.msra.mxu0 %v552
  %749 = vmatprep.subr.mxu0 0.0
  %750 = vmatpush2.msra.mxu0 %v551
  %751 = vmatprep.subr.mxu0 0.0
  %752 = vmatpush2.msra.mxu0 %v550
  %753 = vmatprep.subr.mxu0 0.0
  %754 = vmatpush2.msra.mxu0 %v549
  %755 = vmatprep.subr.mxu0 0.0
  %756 = vmatpush2.msra.mxu0 %v548
  %757 = vmatprep.subr.mxu0 0.0
  %758 = vmatpush2.msra.mxu0 %v547
  %759 = vmatprep.subr.mxu0 0.0
  %760 = vmatpush2.msra.mxu0 %v546
  %761 = vmatprep.mubr.f32.mxu0 %v521
  %762 = vmatmul.mubr.f32.gmra.mxu0 %v520
  %v763 = vpop.f32.mrf.mxu0
  %v764 = vadd.f32 %v695, %v763
  %v765 = vpop.f32.mrf.mxu0
  %766 = vdwg.mxu0
  %767 = vmatprep.subr.mxu0 0.0
  %768 = vmatpush1.msra.mxu0 %v577
  %769 = vmatprep.subr.mxu0 0.0
  %770 = vmatpush1.msra.mxu0 %v576
  %771 = vmatprep.subr.mxu0 0.0
  %772 = vmatpush1.msra.mxu0 %v575
  %773 = vmatprep.subr.mxu0 0.0
  %774 = vmatpush1.msra.mxu0 %v574
  %775 = vmatprep.subr.mxu0 0.0
  %776 = vmatpush1.msra.mxu0 %v573
  %777 = vmatprep.subr.mxu0 0.0
  %778 = vmatpush1.msra.mxu0 %v572
  %779 = vmatprep.subr.mxu0 0.0
  %780 = vmatpush1.msra.mxu0 %v571
  %781 = vmatprep.subr.mxu0 0.0
  %782 = vmatpush1.msra.mxu0 %v570
  %783 = vmatprep.subr.mxu0 0.0
  %784 = vmatpush1.msra.mxu0 %v569
  %785 = vmatprep.subr.mxu0 0.0
  %786 = vmatpush1.msra.mxu0 %v568
  %787 = vmatprep.subr.mxu0 0.0
  %788 = vmatpush1.msra.mxu0 %v567
  %789 = vmatprep.subr.mxu0 0.0
  %790 = vmatpush1.msra.mxu0 %v566
  %791 = vmatprep.subr.mxu0 0.0
  %792 = vmatpush1.msra.mxu0 %v565
  %793 = vmatprep.subr.mxu0 0.0
  %794 = vmatpush1.msra.mxu0 %v564
  %795 = vmatprep.subr.mxu0 0.0
  %796 = vmatpush1.msra.mxu0 %v563
  %797 = vmatprep.subr.mxu0 0.0
  %798 = vmatpush1.msra.mxu0 %v562
  %799 = vmatprep.subr.mxu0 0.0
  %800 = vmatpush2.msra.mxu0 %v593
  %801 = vmatprep.subr.mxu0 0.0
  %802 = vmatpush2.msra.mxu0 %v592
  %803 = vmatprep.subr.mxu0 0.0
  %804 = vmatpush2.msra.mxu0 %v591
  %805 = vmatprep.subr.mxu0 0.0
  %806 = vmatpush2.msra.mxu0 %v590
  %807 = vmatprep.subr.mxu0 0.0
  %808 = vmatpush2.msra.mxu0 %v589
  %809 = vmatprep.subr.mxu0 0.0
  %810 = vmatpush2.msra.mxu0 %v588
  %811 = vmatprep.subr.mxu0 0.0
  %812 = vmatpush2.msra.mxu0 %v587
  %813 = vmatprep.subr.mxu0 0.0
  %814 = vmatpush2.msra.mxu0 %v586
  %815 = vmatprep.subr.mxu0 0.0
  %816 = vmatpush2.msra.mxu0 %v585
  %817 = vmatprep.subr.mxu0 0.0
  %818 = vmatpush2.msra.mxu0 %v584
  %819 = vmatprep.subr.mxu0 0.0
  %820 = vmatpush2.msra.mxu0 %v583
  %821 = vmatprep.subr.mxu0 0.0
  %822 = vmatpush2.msra.mxu0 %v582
  %823 = vmatprep.subr.mxu0 0.0
  %824 = vmatpush2.msra.mxu0 %v581
  %825 = vmatprep.subr.mxu0 0.0
  %826 = vmatpush2.msra.mxu0 %v580
  %827 = vmatprep.subr.mxu0 0.0
  %828 = vmatpush2.msra.mxu0 %v579
  %829 = vmatprep.subr.mxu0 0.0
  %830 = vmatpush2.msra.mxu0 %v578
  %831 = vmatprep.mubr.f32.mxu0 %v523
  %832 = vmatmul.mubr.f32.gmra.mxu0 %v522
  %v833 = vpop.f32.mrf.mxu0
  %v834 = vadd.f32 %v764, %v833
  %v835 = vpop.f32.mrf.mxu0
  %836 = vdwg.mxu0
  %837 = vmatprep.subr.mxu0 0.0
  %838 = vmatpush1.msra.mxu0 %v609
  %839 = vmatprep.subr.mxu0 0.0
  %840 = vmatpush1.msra.mxu0 %v608
  %841 = vmatprep.subr.mxu0 0.0
  %842 = vmatpush1.msra.mxu0 %v607
  %843 = vmatprep.subr.mxu0 0.0
  %844 = vmatpush1.msra.mxu0 %v606
  %845 = vmatprep.subr.mxu0 0.0
  %846 = vmatpush1.msra.mxu0 %v605
  %847 = vmatprep.subr.mxu0 0.0
  %848 = vmatpush1.msra.mxu0 %v604
  %849 = vmatprep.subr.mxu0 0.0
  %850 = vmatpush1.msra.mxu0 %v603
  %851 = vmatprep.subr.mxu0 0.0
  %852 = vmatpush1.msra.mxu0 %v602
  %853 = vmatprep.subr.mxu0 0.0
  %854 = vmatpush1.msra.mxu0 %v601
  %855 = vmatprep.subr.mxu0 0.0
  %856 = vmatpush1.msra.mxu0 %v600
  %857 = vmatprep.subr.mxu0 0.0
  %858 = vmatpush1.msra.mxu0 %v599
  %859 = vmatprep.subr.mxu0 0.0
  %860 = vmatpush1.msra.mxu0 %v598
  %861 = vmatprep.subr.mxu0 0.0
  %862 = vmatpush1.msra.mxu0 %v597
  %863 = vmatprep.subr.mxu0 0.0
  %864 = vmatpush1.msra.mxu0 %v596
  %865 = vmatprep.subr.mxu0 0.0
  %866 = vmatpush1.msra.mxu0 %v595
  %867 = vmatprep.subr.mxu0 0.0
  %868 = vmatpush1.msra.mxu0 %v594
  %869 = vmatprep.subr.mxu0 0.0
  %870 = vmatpush2.msra.mxu0 %v625
  %871 = vmatprep.subr.mxu0 0.0
  %872 = vmatpush2.msra.mxu0 %v624
  %873 = vmatprep.subr.mxu0 0.0
  %874 = vmatpush2.msra.mxu0 %v623
  %875 = vmatprep.subr.mxu0 0.0
  %876 = vmatpush2.msra.mxu0 %v622
  %877 = vmatprep.subr.mxu0 0.0
  %878 = vmatpush2.msra.mxu0 %v621
  %879 = vmatprep.subr.mxu0 0.0
  %880 = vmatpush2.msra.mxu0 %v620
  %881 = vmatprep.subr.mxu0 0.0
  %882 = vmatpush2.msra.mxu0 %v619
  %883 = vmatprep.subr.mxu0 0.0
  %884 = vmatpush2.msra.mxu0 %v618
  %885 = vmatprep.subr.mxu0 0.0
  %886 = vmatpush2.msra.mxu0 %v617
  %887 = vmatprep.subr.mxu0 0.0
  %888 = vmatpush2.msra.mxu0 %v616
  %889 = vmatprep.subr.mxu0 0.0
  %890 = vmatpush2.msra.mxu0 %v615
  %891 = vmatprep.subr.mxu0 0.0
  %892 = vmatpush2.msra.mxu0 %v614
  %893 = vmatprep.subr.mxu0 0.0
  %894 = vmatpush2.msra.mxu0 %v613
  %895 = vmatprep.subr.mxu0 0.0
  %896 = vmatpush2.msra.mxu0 %v612
  %897 = vmatprep.subr.mxu0 0.0
  %898 = vmatpush2.msra.mxu0 %v611
  %899 = vmatprep.subr.mxu0 0.0
  %900 = vmatpush2.msra.mxu0 %v610
  %901 = vmatprep.mubr.f32.mxu0 %v525
  %902 = vmatmul.mubr.f32.gmra.mxu0 %v524
  %v903 = vpop.f32.mrf.mxu0
  %v904 = vadd.f32 %v834, %v903
  %v905 = vpop.f32.mrf.mxu0
  %906 = vdwg.mxu0
  %907 = vmatprep.subr.mxu0 0.0
  %908 = vmatpush1.msra.mxu0 %v641
  %909 = vmatprep.subr.mxu0 0.0
  %910 = vmatpush1.msra.mxu0 %v640
  %911 = vmatprep.subr.mxu0 0.0
  %912 = vmatpush1.msra.mxu0 %v639
  %913 = vmatprep.subr.mxu0 0.0
  %914 = vmatpush1.msra.mxu0 %v638
  %915 = vmatprep.subr.mxu0 0.0
  %916 = vmatpush1.msra.mxu0 %v637
  %917 = vmatprep.subr.mxu0 0.0
  %918 = vmatpush1.msra.mxu0 %v636
  %919 = vmatprep.subr.mxu0 0.0
  %920 = vmatpush1.msra.mxu0 %v635
  %921 = vmatprep.subr.mxu0 0.0
  %922 = vmatpush1.msra.mxu0 %v634
  %923 = vmatprep.subr.mxu0 0.0
  %924 = vmatpush1.msra.mxu0 %v633
  %925 = vmatprep.subr.mxu0 0.0
  %926 = vmatpush1.msra.mxu0 %v632
  %927 = vmatprep.subr.mxu0 0.0
  %928 = vmatpush1.msra.mxu0 %v631
  %929 = vmatprep.subr.mxu0 0.0
  %930 = vmatpush1.msra.mxu0 %v630
  %931 = vmatprep.subr.mxu0 0.0
  %932 = vmatpush1.msra.mxu0 %v629
  %933 = vmatprep.subr.mxu0 0.0
  %934 = vmatpush1.msra.mxu0 %v628
  %935 = vmatprep.subr.mxu0 0.0
  %936 = vmatpush1.msra.mxu0 %v627
  %937 = vmatprep.subr.mxu0 0.0
  %938 = vmatpush1.msra.mxu0 %v626
  %939 = vmatprep.subr.mxu0 0.0
  %940 = vmatpush2.msra.mxu0 %v657
  %941 = vmatprep.subr.mxu0 0.0
  %942 = vmatpush2.msra.mxu0 %v656
  %943 = vmatprep.subr.mxu0 0.0
  %944 = vmatpush2.msra.mxu0 %v655
  %945 = vmatprep.subr.mxu0 0.0
  %946 = vmatpush2.msra.mxu0 %v654
  %947 = vmatprep.subr.mxu0 0.0
  %948 = vmatpush2.msra.mxu0 %v653
  %949 = vmatprep.subr.mxu0 0.0
  %950 = vmatpush2.msra.mxu0 %v652
  %951 = vmatprep.subr.mxu0 0.0
  %952 = vmatpush2.msra.mxu0 %v651
  %953 = vmatprep.subr.mxu0 0.0
  %954 = vmatpush2.msra.mxu0 %v650
  %955 = vmatprep.subr.mxu0 0.0
  %956 = vmatpush2.msra.mxu0 %v649
  %957 = vmatprep.subr.mxu0 0.0
  %958 = vmatpush2.msra.mxu0 %v648
  %959 = vmatprep.subr.mxu0 0.0
  %960 = vmatpush2.msra.mxu0 %v647
  %961 = vmatprep.subr.mxu0 0.0
  %962 = vmatpush2.msra.mxu0 %v646
  %963 = vmatprep.subr.mxu0 0.0
  %964 = vmatpush2.msra.mxu0 %v645
  %965 = vmatprep.subr.mxu0 0.0
  %966 = vmatpush2.msra.mxu0 %v644
  %967 = vmatprep.subr.mxu0 0.0
  %968 = vmatpush2.msra.mxu0 %v643
  %969 = vmatprep.subr.mxu0 0.0
  %970 = vmatpush2.msra.mxu0 %v642
  %971 = vmatprep.mubr.f32.mxu0 %v527
  %972 = vmatmul.mubr.f32.gmra.mxu0 %v526
  %v973 = vpop.f32.mrf.mxu0
  %v974 = vadd.f32 %v904, %v973
  %v975 = vpop.f32.mrf.mxu0
  %976 = vdwg.mxu0
  %977 = vmatprep.subr.mxu0 0.0
  %978 = vmatpush1.msra.mxu0 %v673
  %979 = vmatprep.subr.mxu0 0.0
  %980 = vmatpush1.msra.mxu0 %v672
  %981 = vmatprep.subr.mxu0 0.0
  %982 = vmatpush1.msra.mxu0 %v671
  %983 = vmatprep.subr.mxu0 0.0
  %984 = vmatpush1.msra.mxu0 %v670
  %985 = vmatprep.subr.mxu0 0.0
  %986 = vmatpush1.msra.mxu0 %v669
  %987 = vmatprep.subr.mxu0 0.0
  %988 = vmatpush1.msra.mxu0 %v668
  %989 = vmatprep.subr.mxu0 0.0
  %990 = vmatpush1.msra.mxu0 %v667
  %991 = vmatprep.subr.mxu0 0.0
  %992 = vmatpush1.msra.mxu0 %v666
  %993 = vmatprep.subr.mxu0 0.0
  %994 = vmatpush1.msra.mxu0 %v665
  %995 = vmatprep.subr.mxu0 0.0
  %996 = vmatpush1.msra.mxu0 %v664
  %997 = vmatprep.subr.mxu0 0.0
  %998 = vmatpush1.msra.mxu0 %v663
  %999 = vmatprep.subr.mxu0 0.0
  %1000 = vmatpush1.msra.mxu0 %v662
  %1001 = vmatprep.subr.mxu0 0.0
  %1002 = vmatpush1.msra.mxu0 %v661
  %1003 = vmatprep.subr.mxu0 0.0
  %1004 = vmatpush1.msra.mxu0 %v660
  %1005 = vmatprep.subr.mxu0 0.0
  %1006 = vmatpush1.msra.mxu0 %v659
  %1007 = vmatprep.subr.mxu0 0.0
  %1008 = vmatpush1.msra.mxu0 %v658
  %1009 = vmatprep.subr.mxu0 0.0
  %1010 = vmatpush2.msra.mxu0 %v689
  %1011 = vmatprep.subr.mxu0 0.0
  %1012 = vmatpush2.msra.mxu0 %v688
  %1013 = vmatprep.subr.mxu0 0.0
  %1014 = vmatpush2.msra.mxu0 %v687
  %1015 = vmatprep.subr.mxu0 0.0
  %1016 = vmatpush2.msra.mxu0 %v686
  %1017 = vmatprep.subr.mxu0 0.0
  %1018 = vmatpush2.msra.mxu0 %v685
  %1019 = vmatprep.subr.mxu0 0.0
  %1020 = vmatpush2.msra.mxu0 %v684
  %1021 = vmatprep.subr.mxu0 0.0
  %1022 = vmatpush2.msra.mxu0 %v683
  %1023 = vmatprep.subr.mxu0 0.0
  %1024 = vmatpush2.msra.mxu0 %v682
  %1025 = vmatprep.subr.mxu0 0.0
  %1026 = vmatpush2.msra.mxu0 %v681
  %1027 = vmatprep.subr.mxu0 0.0
  %1028 = vmatpush2.msra.mxu0 %v680
  %1029 = vmatprep.subr.mxu0 0.0
  %1030 = vmatpush2.msra.mxu0 %v679
  %1031 = vmatprep.subr.mxu0 0.0
  %1032 = vmatpush2.msra.mxu0 %v678
  %1033 = vmatprep.subr.mxu0 0.0
  %1034 = vmatpush2.msra.mxu0 %v677
  %1035 = vmatprep.subr.mxu0 0.0
  %1036 = vmatpush2.msra.mxu0 %v676
  %1037 = vmatprep.subr.mxu0 0.0
  %1038 = vmatpush2.msra.mxu0 %v675
  %1039 = vmatprep.subr.mxu0 0.0
  %1040 = vmatpush2.msra.mxu0 %v674
  %1041 = vmatprep.mubr.f32.mxu0 %v529
  %1042 = vmatmul.mubr.f32.gmra.mxu0 %v528
  %v1043 = vpop.f32.mrf.mxu0
  %v1044 = vadd.f32 %v974, %v1043
  %v1045 = vpop.f32.mrf.mxu0
  %1046 = vdwg.mxu0
  %v1047 = vlaneseq
  %v1048 = vand.u32 %v1047, 127
  %vm1049 = vcmp.eq.s32.totalorder %v1048, 2
  %v1050 = vmul.f32 %v1044, 0.5
  %v1051 = vtanh.pop %v1050
  %v1052 = vadd.f32 %v1051, 1.0
  %v1053 = vmul.f32 %v1052, 0.5
  %v1054 = vsel %vm1049, %v1053, %v1044
  %vm1055 = vcmask 91136
  %1056 = vst.msk [vmem:[%s5] sm:$0x3] %vm1055, %v1054
  // Predicated region
  $region22: #{efficientnet_forward.3} parent=0 // pred_check
    _
  $region23: #{efficientnet_forward.3} parent=0 // pred_check_branch
    %1058 = sbr.rel (0) target = $region25
  $region24: #{efficientnet_forward.3} parent=0 // pred_region
    _
  $region25: #{efficientnet_forward.3} parent=0 // pred_fallthru
    _
  // Predicated region
  $region26: #{efficientnet_forward.3} parent=0 // pred_check
    _
  $region27: #{efficientnet_forward.3} parent=0 // pred_check_branch
    %1060 = sbr.rel (0) target = $region29
  $region28: #{efficientnet_forward.3} parent=0 // pred_region
    _
  $region29: #{efficientnet_forward.3} parent=0 // pred_fallthru
    _

</llo_original>
